<compile_context>
chip_gen: v6e
topology: v6e:2x2x1
jax: 0.10.0
libtpu: 0.0.40
codegen_flags: <defaults>
</compile_context>

<pallas_src>
import math
import jax
import jax.numpy as jnp
from jax.experimental import pallas as pl

# ---- model hyper-params (small, consistent with the module) ----
BATCH = 2
SEQ = 8
D_MODEL = 32
NUM_HEADS = 4
D_K = D_MODEL // NUM_HEADS
BS = BATCH * SEQ                      # batch*seq rows


def mha_kernel(q_ref, k_ref, v_ref, wqkv_ref, bqkv_ref, wo_ref, bo_ref, o_ref):
    """Fused multi-head attention, single invocation (all refs are whole-array VMEM blocks).

    Refs:
      q_ref/k_ref/v_ref : (B, S, D)   activations
      wqkv_ref          : (3, D, D)   [Wq*1/sqrt(dk), Wk, Wv]   (in_features, out_features)
      bqkv_ref          : (3, 1, D)   [bq*1/sqrt(dk), bk, bv]
      wo_ref            : (D, D)      output projection weight
      bo_ref            : (1, D)      output projection bias
      o_ref             : (B, S, D)
    """
    f32 = jnp.float32

    xq = q_ref[...].reshape(BS, D_MODEL)
    xk = k_ref[...].reshape(BS, D_MODEL)
    xv = v_ref[...].reshape(BS, D_MODEL)

    # --- Q/K/V projections: three (BS, 32) @ (32, 32) MXU dots.
    #     1/sqrt(d_k) is pre-folded into Wq / bq at parameter-prep time (no in-kernel scaling).
    qp = jnp.dot(xq, wqkv_ref[0], preferred_element_type=f32) + bqkv_ref[0]
    kp = jnp.dot(xk, wqkv_ref[1], preferred_element_type=f32) + bqkv_ref[1]
    vp = jnp.dot(xv, wqkv_ref[2], preferred_element_type=f32) + bqkv_ref[2]

    def to_heads(y):
        # (BS, D) -> (H*B, S, DK): split heads off the lane axis with static slices,
        # stack them onto the leading (batch-of-dots) axis. n = h*B + b.
        y3 = y.reshape(BATCH, SEQ, D_MODEL)
        return jnp.concatenate(
            [y3[:, :, h * D_K:(h + 1) * D_K] for h in range(NUM_HEADS)], axis=0)

    q = to_heads(qp)          # (H*B, S, DK) — already scaled by 1/sqrt(dk)
    k = to_heads(kp)
    v = to_heads(vp)

    # --- attention, fully batched over (head, batch): no block mask needed.
    scores = jnp.einsum("nqd,nkd->nqk", q, k, preferred_element_type=f32)   # (H*B, S, S)
    scores = scores - jnp.max(scores, axis=-1, keepdims=True)
    e = jnp.exp(scores)
    attn = e * pl.reciprocal(jnp.sum(e, axis=-1, keepdims=True), approx=True)
    # TODO(synk): dropout on attention weights skipped (identity in eval mode).
    ctx = jnp.einsum("nqk,nkd->nqd", attn, v, preferred_element_type=f32)   # (H*B, S, DK)

    # --- put heads back on the lane axis: (H*B, S, DK) -> (BS, H*DK)
    ctx4 = ctx.reshape(NUM_HEADS, BATCH, SEQ, D_K)
    ctx_bs = jnp.concatenate([ctx4[h] for h in range(NUM_HEADS)], axis=-1)  # (B, S, D)
    ctx_flat = ctx_bs.reshape(BS, D_MODEL)

    # --- single output projection: (BS, 32) @ (32, 32), K = d_model (no per-head reduce).
    out = jnp.dot(ctx_flat, wo_ref[...], preferred_element_type=f32) + bo_ref[...]
    o_ref[...] = out.reshape(BATCH, SEQ, D_MODEL).astype(o_ref.dtype)


def prepare_params(params):
    """One-time parameter prep (hoisted out of the per-call path).

    Folds 1/sqrt(d_k) into Wq/bq and stacks the Q/K/V projection weights/biases.
    Weights are stored (in_features, out_features), so y = x @ W + b matches nn.Linear.
    """
    wq, bq, wk, bk, wv, bv, wo, bo = params
    scale = 1.0 / math.sqrt(D_K)
    wqkv = jnp.stack([wq * scale, wk, wv], axis=0)    # (3, D, D)
    bqkv = jnp.stack([bq * scale, bk, bv], axis=0)    # (3, 1, D)
    return (wqkv, bqkv, wo, bo)


@jax.jit
def multi_head_attention(query, key, value, packed_params):
    """query/key/value: (B, S, D) float32.  packed_params from prepare_params()."""
    wqkv, bqkv, wo, bo = packed_params
    return pl.pallas_call(
        mha_kernel,
        out_shape=jax.ShapeDtypeStruct(query.shape, query.dtype),
        # grid=() : single invocation; every operand is a whole-array VMEM block
        # (total working set ~20 KB, far under any VMEM budget incl. v7x's 64 MiB).
    )(query, key, value, wqkv, bqkv, wo, bo)


def reference_mha(query, key, value, params):
    """Pure-JAX reference mirroring the PyTorch forward (dropout = identity)."""
    wq, bq, wk, bk, wv, bv, wo, bo = params
    B, S, D = query.shape
    Q = query @ wq + bq
    K = key @ wk + bk
    V = value @ wv + bv
    Q = Q.reshape(B, S, NUM_HEADS, D_K).transpose(0, 2, 1, 3)
    K = K.reshape(B, S, NUM_HEADS, D_K).transpose(0, 2, 1, 3)
    V = V.reshape(B, S, NUM_HEADS, D_K).transpose(0, 2, 1, 3)
    scores = jnp.einsum("bhqd,bhkd->bhqk", Q, K) / math.sqrt(D_K)
    attn = jax.nn.softmax(scores, axis=-1)
    out = jnp.einsum("bhqk,bhkd->bhqd", attn, V)
    out = out.transpose(0, 2, 1, 3).reshape(B, S, D)
    return out @ wo + bo


def init_params(key):
    """Deterministic synthetic init (nn.Linear-like uniform)."""
    bound = 1.0 / math.sqrt(D_MODEL)
    ks = jax.random.split(key, 8)
    mk = lambda k, shp: jax.random.uniform(k, shp, jnp.float32, -bound, bound)
    wq, wk, wv, wo = (mk(ks[i], (D_MODEL, D_MODEL)) for i in range(4))
    bq, bk, bv, bo = (mk(ks[4 + i], (1, D_MODEL)) for i in range(4))
    return (wq, bq, wk, bk, wv, bv, wo, bo)


if __name__ == "__main__":
    root = jax.random.PRNGKey(0)
    kq, kk, kv, kp = jax.random.split(root, 4)

    query = jax.random.normal(kq, (BATCH, SEQ, D_MODEL), jnp.float32)
    key = jax.random.normal(kk, (BATCH, SEQ, D_MODEL), jnp.float32)
    value = jax.random.normal(kv, (BATCH, SEQ, D_MODEL), jnp.float32)
    params = init_params(kp)

    packed = prepare_params(params)            # one-time packing, not in the per-call path
    out = multi_head_attention(query, key, value, packed)
    out = jax.block_until_ready(out)

    ref = reference_mha(query, key, value, params)
    assert out.shape == (BATCH, SEQ, D_MODEL)
    # Tolerance covers the approximate EUP reciprocal in the softmax denominator.
    assert jnp.allclose(out, ref, atol=2e-3, rtol=2e-3), "mismatch vs reference"

    print("KERNEL_OK")
</pallas_src>

<mosaic_0001>
module attributes {stable_mosaic.version = 11 : i64} {
  func.func @mha_kernel(%arg0: memref<2x8x32xf32, #tpu.memory_space<vmem>>, %arg1: memref<2x8x32xf32, #tpu.memory_space<vmem>>, %arg2: memref<2x8x32xf32, #tpu.memory_space<vmem>>, %arg3: memref<3x32x32xf32, #tpu.memory_space<vmem>>, %arg4: memref<3x1x32xf32, #tpu.memory_space<vmem>>, %arg5: memref<32x32xf32, #tpu.memory_space<vmem>>, %arg6: memref<1x32xf32, #tpu.memory_space<vmem>>, %arg7: memref<2x8x32xf32, #tpu.memory_space<vmem>>) attributes {dimension_semantics = [], scalar_prefetch = 0 : i64, scratch_operands = 0 : i64, tpu.core_type = #tpu.core_type<tc>} {
    %c0 = arith.constant 0 : index
    %c0_0 = arith.constant 0 : index
    %c0_1 = arith.constant 0 : index
    %0 = vector.load %arg0[%c0, %c0_0, %c0_1] : memref<2x8x32xf32, #tpu.memory_space<vmem>>, vector<2x8x32xf32>
    %1 = vector.shape_cast %0 : vector<2x8x32xf32> to vector<16x32xf32>
    %c0_2 = arith.constant 0 : index
    %c0_3 = arith.constant 0 : index
    %c0_4 = arith.constant 0 : index
    %2 = vector.load %arg1[%c0_2, %c0_3, %c0_4] : memref<2x8x32xf32, #tpu.memory_space<vmem>>, vector<2x8x32xf32>
    %3 = vector.shape_cast %2 : vector<2x8x32xf32> to vector<16x32xf32>
    %c0_5 = arith.constant 0 : index
    %c0_6 = arith.constant 0 : index
    %c0_7 = arith.constant 0 : index
    %4 = vector.load %arg2[%c0_5, %c0_6, %c0_7] : memref<2x8x32xf32, #tpu.memory_space<vmem>>, vector<2x8x32xf32>
    %5 = vector.shape_cast %4 : vector<2x8x32xf32> to vector<16x32xf32>
    %c0_8 = arith.constant 0 : index
    %c0_9 = arith.constant 0 : index
    %c0_10 = arith.constant 0 : index
    %6 = vector.load %arg3[%c0_8, %c0_9, %c0_10] : memref<3x32x32xf32, #tpu.memory_space<vmem>>, vector<1x32x32xf32>
    %7 = vector.shape_cast %6 : vector<1x32x32xf32> to vector<32x32xf32>
    %cst = arith.constant dense<0.000000e+00> : vector<16x32xf32>
    %8 = tpu.matmul %1, %7, %cst {dimension_numbers = #tpu.dot_dimension_numbers<[1], [0], [0], [1], [0, 0, 1, 1], [], []>} : vector<16x32xf32>, vector<32x32xf32>, vector<16x32xf32> -> vector<16x32xf32>
    %c0_11 = arith.constant 0 : index
    %c0_12 = arith.constant 0 : index
    %c0_13 = arith.constant 0 : index
    %9 = vector.load %arg4[%c0_11, %c0_12, %c0_13] : memref<3x1x32xf32, #tpu.memory_space<vmem>>, vector<1x1x32xf32>
    %10 = vector.shape_cast %9 : vector<1x1x32xf32> to vector<1x32xf32>
    %11 = vector.broadcast %10 : vector<1x32xf32> to vector<16x32xf32>
    %12 = arith.addf %8, %11 : vector<16x32xf32>
    %c1 = arith.constant 1 : index
    %c0_14 = arith.constant 0 : index
    %c0_15 = arith.constant 0 : index
    %13 = vector.load %arg3[%c1, %c0_14, %c0_15] : memref<3x32x32xf32, #tpu.memory_space<vmem>>, vector<1x32x32xf32>
    %14 = vector.shape_cast %13 : vector<1x32x32xf32> to vector<32x32xf32>
    %cst_16 = arith.constant dense<0.000000e+00> : vector<16x32xf32>
    %15 = tpu.matmul %3, %14, %cst_16 {dimension_numbers = #tpu.dot_dimension_numbers<[1], [0], [0], [1], [0, 0, 1, 1], [], []>} : vector<16x32xf32>, vector<32x32xf32>, vector<16x32xf32> -> vector<16x32xf32>
    %c1_17 = arith.constant 1 : index
    %c0_18 = arith.constant 0 : index
    %c0_19 = arith.constant 0 : index
    %16 = vector.load %arg4[%c1_17, %c0_18, %c0_19] : memref<3x1x32xf32, #tpu.memory_space<vmem>>, vector<1x1x32xf32>
    %17 = vector.shape_cast %16 : vector<1x1x32xf32> to vector<1x32xf32>
    %18 = vector.broadcast %17 : vector<1x32xf32> to vector<16x32xf32>
    %19 = arith.addf %15, %18 : vector<16x32xf32>
    %c2 = arith.constant 2 : index
    %c0_20 = arith.constant 0 : index
    %c0_21 = arith.constant 0 : index
    %20 = vector.load %arg3[%c2, %c0_20, %c0_21] : memref<3x32x32xf32, #tpu.memory_space<vmem>>, vector<1x32x32xf32>
    %21 = vector.shape_cast %20 : vector<1x32x32xf32> to vector<32x32xf32>
    %cst_22 = arith.constant dense<0.000000e+00> : vector<16x32xf32>
    %22 = tpu.matmul %5, %21, %cst_22 {dimension_numbers = #tpu.dot_dimension_numbers<[1], [0], [0], [1], [0, 0, 1, 1], [], []>} : vector<16x32xf32>, vector<32x32xf32>, vector<16x32xf32> -> vector<16x32xf32>
    %c2_23 = arith.constant 2 : index
    %c0_24 = arith.constant 0 : index
    %c0_25 = arith.constant 0 : index
    %23 = vector.load %arg4[%c2_23, %c0_24, %c0_25] : memref<3x1x32xf32, #tpu.memory_space<vmem>>, vector<1x1x32xf32>
    %24 = vector.shape_cast %23 : vector<1x1x32xf32> to vector<1x32xf32>
    %25 = vector.broadcast %24 : vector<1x32xf32> to vector<16x32xf32>
    %26 = arith.addf %22, %25 : vector<16x32xf32>
    %27 = vector.shape_cast %12 : vector<16x32xf32> to vector<2x8x32xf32>
    %28 = vector.extract_strided_slice %27 {offsets = [0, 0, 0], sizes = [2, 8, 8], strides = [1, 1, 1]} : vector<2x8x32xf32> to vector<2x8x8xf32>
    %29 = vector.extract_strided_slice %27 {offsets = [0, 0, 8], sizes = [2, 8, 8], strides = [1, 1, 1]} : vector<2x8x32xf32> to vector<2x8x8xf32>
    %30 = vector.extract_strided_slice %27 {offsets = [0, 0, 16], sizes = [2, 8, 8], strides = [1, 1, 1]} : vector<2x8x32xf32> to vector<2x8x8xf32>
    %31 = vector.extract_strided_slice %27 {offsets = [0, 0, 24], sizes = [2, 8, 8], strides = [1, 1, 1]} : vector<2x8x32xf32> to vector<2x8x8xf32>
    %32 = tpu.concatenate %28, %29, %30, %31 in 0 : vector<2x8x8xf32>, vector<2x8x8xf32>, vector<2x8x8xf32>, vector<2x8x8xf32> -> vector<8x8x8xf32>
    %33 = vector.shape_cast %19 : vector<16x32xf32> to vector<2x8x32xf32>
    %34 = vector.extract_strided_slice %33 {offsets = [0, 0, 0], sizes = [2, 8, 8], strides = [1, 1, 1]} : vector<2x8x32xf32> to vector<2x8x8xf32>
    %35 = vector.extract_strided_slice %33 {offsets = [0, 0, 8], sizes = [2, 8, 8], strides = [1, 1, 1]} : vector<2x8x32xf32> to vector<2x8x8xf32>
    %36 = vector.extract_strided_slice %33 {offsets = [0, 0, 16], sizes = [2, 8, 8], strides = [1, 1, 1]} : vector<2x8x32xf32> to vector<2x8x8xf32>
    %37 = vector.extract_strided_slice %33 {offsets = [0, 0, 24], sizes = [2, 8, 8], strides = [1, 1, 1]} : vector<2x8x32xf32> to vector<2x8x8xf32>
    %38 = tpu.concatenate %34, %35, %36, %37 in 0 : vector<2x8x8xf32>, vector<2x8x8xf32>, vector<2x8x8xf32>, vector<2x8x8xf32> -> vector<8x8x8xf32>
    %39 = vector.shape_cast %26 : vector<16x32xf32> to vector<2x8x32xf32>
    %40 = vector.extract_strided_slice %39 {offsets = [0, 0, 0], sizes = [2, 8, 8], strides = [1, 1, 1]} : vector<2x8x32xf32> to vector<2x8x8xf32>
    %41 = vector.extract_strided_slice %39 {offsets = [0, 0, 8], sizes = [2, 8, 8], strides = [1, 1, 1]} : vector<2x8x32xf32> to vector<2x8x8xf32>
    %42 = vector.extract_strided_slice %39 {offsets = [0, 0, 16], sizes = [2, 8, 8], strides = [1, 1, 1]} : vector<2x8x32xf32> to vector<2x8x8xf32>
    %43 = vector.extract_strided_slice %39 {offsets = [0, 0, 24], sizes = [2, 8, 8], strides = [1, 1, 1]} : vector<2x8x32xf32> to vector<2x8x8xf32>
    %44 = tpu.concatenate %40, %41, %42, %43 in 0 : vector<2x8x8xf32>, vector<2x8x8xf32>, vector<2x8x8xf32>, vector<2x8x8xf32> -> vector<8x8x8xf32>
    "tpu.trace_start"() <{level = 10 : i32, message = "nqd,nkd->nqk"}> : () -> ()
    %cst_26 = arith.constant dense<0.000000e+00> : vector<8x8x8xf32>
    %45 = tpu.matmul %32, %38, %cst_26 {dimension_numbers = #tpu.dot_dimension_numbers<[2], [2], [1], [1], [0, 0, 0, 1, 1, 1], [0], [0]>} : vector<8x8x8xf32>, vector<8x8x8xf32>, vector<8x8x8xf32> -> vector<8x8x8xf32>
    "tpu.trace_stop"() : () -> ()
    %cst_27 = arith.constant dense<0xFF800000> : vector<8x8xf32>
    %46 = vector.multi_reduction <maximumf>, %45, %cst_27 [2] : vector<8x8x8xf32> to vector<8x8xf32>
    %47 = vector.shape_cast %46 : vector<8x8xf32> to vector<8x8x1xf32>
    %48 = vector.broadcast %47 : vector<8x8x1xf32> to vector<8x8x8xf32>
    %49 = arith.subf %45, %48 : vector<8x8x8xf32>
    %50 = math.exp %49 : vector<8x8x8xf32>
    %cst_28 = arith.constant dense<0.000000e+00> : vector<8x8xf32>
    %51 = vector.multi_reduction <add>, %50, %cst_28 [2] : vector<8x8x8xf32> to vector<8x8xf32>
    %52 = vector.shape_cast %51 : vector<8x8xf32> to vector<8x8x1xf32>
    %53 = tpu.reciprocal %52 {approx = true} : vector<8x8x1xf32> -> vector<8x8x1xf32>
    %54 = vector.broadcast %53 : vector<8x8x1xf32> to vector<8x8x8xf32>
    %55 = arith.mulf %50, %54 : vector<8x8x8xf32>
    "tpu.trace_start"() <{level = 10 : i32, message = "nqk,nkd->nqd"}> : () -> ()
    %cst_29 = arith.constant dense<0.000000e+00> : vector<8x8x8xf32>
    %56 = tpu.matmul %55, %44, %cst_29 {dimension_numbers = #tpu.dot_dimension_numbers<[2], [1], [1], [2], [0, 0, 0, 1, 1, 2], [0], [0]>} : vector<8x8x8xf32>, vector<8x8x8xf32>, vector<8x8x8xf32> -> vector<8x8x8xf32>
    "tpu.trace_stop"() : () -> ()
    %57 = vector.shape_cast %56 : vector<8x8x8xf32> to vector<4x2x8x8xf32>
    %58 = vector.extract_strided_slice %57 {offsets = [0, 0, 0, 0], sizes = [1, 2, 8, 8], strides = [1, 1, 1, 1]} : vector<4x2x8x8xf32> to vector<1x2x8x8xf32>
    %59 = vector.shape_cast %58 : vector<1x2x8x8xf32> to vector<2x8x8xf32>
    %60 = vector.extract_strided_slice %57 {offsets = [1, 0, 0, 0], sizes = [1, 2, 8, 8], strides = [1, 1, 1, 1]} : vector<4x2x8x8xf32> to vector<1x2x8x8xf32>
    %61 = vector.shape_cast %60 : vector<1x2x8x8xf32> to vector<2x8x8xf32>
    %62 = vector.extract_strided_slice %57 {offsets = [2, 0, 0, 0], sizes = [1, 2, 8, 8], strides = [1, 1, 1, 1]} : vector<4x2x8x8xf32> to vector<1x2x8x8xf32>
    %63 = vector.shape_cast %62 : vector<1x2x8x8xf32> to vector<2x8x8xf32>
    %64 = vector.extract_strided_slice %57 {offsets = [3, 0, 0, 0], sizes = [1, 2, 8, 8], strides = [1, 1, 1, 1]} : vector<4x2x8x8xf32> to vector<1x2x8x8xf32>
    %65 = vector.shape_cast %64 : vector<1x2x8x8xf32> to vector<2x8x8xf32>
    %66 = tpu.concatenate %59, %61, %63, %65 in 2 : vector<2x8x8xf32>, vector<2x8x8xf32>, vector<2x8x8xf32>, vector<2x8x8xf32> -> vector<2x8x32xf32>
    %67 = vector.shape_cast %66 : vector<2x8x32xf32> to vector<16x32xf32>
    %c0_30 = arith.constant 0 : index
    %c0_31 = arith.constant 0 : index
    %68 = vector.load %arg5[%c0_30, %c0_31] : memref<32x32xf32, #tpu.memory_space<vmem>>, vector<32x32xf32>
    %cst_32 = arith.constant dense<0.000000e+00> : vector<16x32xf32>
    %69 = tpu.matmul %67, %68, %cst_32 {dimension_numbers = #tpu.dot_dimension_numbers<[1], [0], [0], [1], [0, 0, 1, 1], [], []>} : vector<16x32xf32>, vector<32x32xf32>, vector<16x32xf32> -> vector<16x32xf32>
    %c0_33 = arith.constant 0 : index
    %c0_34 = arith.constant 0 : index
    %70 = vector.load %arg6[%c0_33, %c0_34] : memref<1x32xf32, #tpu.memory_space<vmem>>, vector<1x32xf32>
    %71 = vector.broadcast %70 : vector<1x32xf32> to vector<16x32xf32>
    %72 = arith.addf %69, %71 : vector<16x32xf32>
    %73 = vector.shape_cast %72 : vector<16x32xf32> to vector<2x8x32xf32>
    %c0_35 = arith.constant 0 : index
    %c0_36 = arith.constant 0 : index
    %c0_37 = arith.constant 0 : index
    %74 = vector.load %arg7[%c0_35, %c0_36, %c0_37] : memref<2x8x32xf32, #tpu.memory_space<vmem>>, vector<2x8x32xf32>
    tpu.vector_store %arg7[%c0_35, %c0_36, %c0_37], %73 {strides = array<i32>} : memref<2x8x32xf32, #tpu.memory_space<vmem>>, vector<2x8x32xf32>,
    return
  }
}

</mosaic_0001>

<llo_original>
// kernel: multi_head_attention.1
$region0: #{multi_head_attention.1}
  #allocation0 [shape = 'u32[]', space=smem, size = 0x4, offset = 0x4, fixed_abs, tag = 'smem constant byte address 0x4 - core index']
  #allocation1 [shape = 'u32[144,128]{1,0:T(1,128)}', space=vmem, size = 0x12000, scoped, tag = 'internal scratch']
  %s0 = inlined_call_operand.hbm [shape: f32[2,8,32], index: 0, kind: input, shape index: {}]
  %s1 = inlined_call_operand.hbm [shape: f32[2,8,32], index: 1, kind: input, shape index: {}]
  %s2 = inlined_call_operand.hbm [shape: f32[2,8,32], index: 2, kind: input, shape index: {}]
  %s3 = inlined_call_operand.hbm [shape: f32[3,32,32], index: 3, kind: input, shape index: {}]
  %s4 = inlined_call_operand.vmem [shape: f32[3,1,32], index: 4, kind: input, shape index: {}]
  %s5 = inlined_call_operand.hbm [shape: f32[32,32], index: 5, kind: input, shape index: {}]
  %s6 = inlined_call_operand.vmem [shape: f32[1,32], index: 6, kind: input, shape index: {}]
  %s7 = inlined_call_operand.hbm [shape: f32[2,8,32], index: 7, kind: output, shape index: {}]
  %s8 = sld [smem:[#allocation0]]
  $region58: #{multi_head_attention.1} parent=0
    _
  %s10 = ssub.s32 1, %s8
  %s11 = scalar_select 0, %s10, %s8
  $region1: #{multi_head_attention.1} parent=0
    #allocation2 [shape = 'u8[8192]{0}', space=vmem, size = 0x2000, scoped, tag = 'input window, operand 0, single buffered']
    #allocation3 [shape = 's32[1]{0}', space=sflag, size = 0x4, scoped, tag = 'scoped memory for multi_head_attention.1']
    #allocation4 [shape = 's32[1]{0}', space=sflag, size = 0x4, scoped, tag = 'scoped memory for multi_head_attention.1']
    #allocation5 [shape = 'u8[8192]{0}', space=vmem, size = 0x2000, scoped, tag = 'input window, operand 1, single buffered']
    #allocation6 [shape = 's32[1]{0}', space=sflag, size = 0x4, scoped, tag = 'scoped memory for multi_head_attention.1']
    #allocation7 [shape = 'u8[8192]{0}', space=vmem, size = 0x2000, scoped, tag = 'input window, operand 2, single buffered']
    #allocation8 [shape = 'u8[49152]{0}', space=vmem, size = 0xc000, scoped, tag = 'input window, operand 3, single buffered']
    #allocation9 [shape = 's32[1]{0}', space=sflag, size = 0x4, scoped, tag = 'scoped memory for multi_head_attention.1']
    #allocation10 [shape = 'u8[16384]{0}', space=vmem, size = 0x4000, scoped, tag = 'input window, operand 5, single buffered']
    #allocation11 [shape = 'u8[8192]{0}', space=vmem, size = 0x2000, scoped, tag = 'output window, operand 0, single buffered']
    %12 = vsyncpa [#allocation3], 0
    %13 = vsyncpa [#allocation6], 0
    %14 = vsyncpa [#allocation9], 0
    %15 = vsyncpa [#allocation4], 0
    // Predicated region
    $region2: #{multi_head_attention.1} parent=1 // pred_check
      _
    $region3: #{multi_head_attention.1} parent=1 // pred_check_branch
      %17 = sbr.rel (0) target = $region5
    $region4: #{multi_head_attention.1} parent=1 // pred_region
      %s19 = ssub.s32 256, 256
      %20 = vsyncadd [#allocation3], %s19
      %s21 = sshll.u32 [#allocation2], 4
      %s22 = int_to_ptr.vmem [resolvable:$true] %s21
      %27 = dma.hbm_to_vmem [thread:$0]  %s0, 256, %s22, [#allocation3], 128, 128, 8
    $region5: #{multi_head_attention.1} parent=1 // pred_fallthru
      _
    // Predicated region
    $region6: #{multi_head_attention.1} parent=1 // pred_check
      _
    $region7: #{multi_head_attention.1} parent=1 // pred_check_branch
      %29 = sbr.rel (0) target = $region9
    $region8: #{multi_head_attention.1} parent=1 // pred_region
      %s31 = ssub.s32 256, 256
      %32 = vsyncadd [#allocation6], %s31
      %s33 = sshll.u32 [#allocation5], 4
      %s34 = int_to_ptr.vmem [resolvable:$true] %s33
      %39 = dma.hbm_to_vmem [thread:$0]  %s1, 256, %s34, [#allocation6], 128, 128, 8
    $region9: #{multi_head_attention.1} parent=1 // pred_fallthru
      _
    // Predicated region
    $region10: #{multi_head_attention.1} parent=1 // pred_check
      _
    $region11: #{multi_head_attention.1} parent=1 // pred_check_branch
      %41 = sbr.rel (0) target = $region13
    $region12: #{multi_head_attention.1} parent=1 // pred_region
      %s43 = ssub.s32 256, 256
      %44 = vsyncadd [#allocation6], %s43
      %s45 = sshll.u32 [#allocation7], 4
      %s46 = int_to_ptr.vmem [resolvable:$true] %s45
      %51 = dma.hbm_to_vmem [thread:$0]  %s2, 256, %s46, [#allocation6], 128, 128, 8
    $region13: #{multi_head_attention.1} parent=1 // pred_fallthru
      _
    // Predicated region
    $region14: #{multi_head_attention.1} parent=1 // pred_check
      _
    $region15: #{multi_head_attention.1} parent=1 // pred_check_branch
      %53 = sbr.rel (0) target = $region17
    $region16: #{multi_head_attention.1} parent=1 // pred_region
      %s55 = ssub.s32 1536, 1536
      %56 = vsyncadd [#allocation9], %s55
      %s57 = sshll.u32 [#allocation8], 4
      %s58 = int_to_ptr.vmem [resolvable:$true] %s57
      %63 = dma.hbm_to_vmem [thread:$0]  %s3, 1536, %s58, [#allocation9], 128, 128, 8
    $region17: #{multi_head_attention.1} parent=1 // pred_fallthru
      _
    // Predicated region
    $region18: #{multi_head_attention.1} parent=1 // pred_check
      _
    $region19: #{multi_head_attention.1} parent=1 // pred_check_branch
      %65 = sbr.rel (0) target = $region21
    $region20: #{multi_head_attention.1} parent=1 // pred_region
      _
    $region21: #{multi_head_attention.1} parent=1 // pred_fallthru
      _
    // Predicated region
    $region22: #{multi_head_attention.1} parent=1 // pred_check
      _
    $region23: #{multi_head_attention.1} parent=1 // pred_check_branch
      %67 = sbr.rel (0) target = $region25
    $region24: #{multi_head_attention.1} parent=1 // pred_region
      %s69 = ssub.s32 512, 512
      %70 = vsyncadd [#allocation9], %s69
      %s71 = sshll.u32 [#allocation10], 4
      %s72 = int_to_ptr.vmem [resolvable:$true] %s71
      %77 = dma.hbm_to_vmem [thread:$0]  %s5, 512, %s72, [#allocation9], 128, 128, 8
    $region25: #{multi_head_attention.1} parent=1 // pred_fallthru
      _
    // Predicated region
    $region26: #{multi_head_attention.1} parent=1 // pred_check
      _
    $region27: #{multi_head_attention.1} parent=1 // pred_check_branch
      %79 = sbr.rel (0) target = $region29
    $region28: #{multi_head_attention.1} parent=1 // pred_region
      _
    $region29: #{multi_head_attention.1} parent=1 // pred_fallthru
      _
    // Predicated region
    $region30: #{multi_head_attention.1} parent=1 // pred_check
      _
    $region31: #{multi_head_attention.1} parent=1 // pred_check_branch
      %81 = sbr.rel (0) target = $region33
    $region32: #{multi_head_attention.1} parent=1 // pred_region
      %82 = dma.done [#allocation3], 256
    $region33: #{multi_head_attention.1} parent=1 // pred_fallthru
      _
    // Predicated region
    $region34: #{multi_head_attention.1} parent=1 // pred_check
      _
    $region35: #{multi_head_attention.1} parent=1 // pred_check_branch
      %84 = sbr.rel (0) target = $region37
    $region36: #{multi_head_attention.1} parent=1 // pred_region
      %85 = dma.done [#allocation6], 256
    $region37: #{multi_head_attention.1} parent=1 // pred_fallthru
      _
    // Predicated region
    $region38: #{multi_head_attention.1} parent=1 // pred_check
      _
    $region39: #{multi_head_attention.1} parent=1 // pred_check_branch
      %87 = sbr.rel (0) target = $region41
    $region40: #{multi_head_attention.1} parent=1 // pred_region
      %88 = dma.done [#allocation6], 256
    $region41: #{multi_head_attention.1} parent=1 // pred_fallthru
      _
    // Predicated region
    $region42: #{multi_head_attention.1} parent=1 // pred_check
      _
    $region43: #{multi_head_attention.1} parent=1 // pred_check_branch
      %90 = sbr.rel (0) target = $region45
    $region44: #{multi_head_attention.1} parent=1 // pred_region
      %91 = dma.done [#allocation9], 1536
    $region45: #{multi_head_attention.1} parent=1 // pred_fallthru
      _
    // Predicated region
    $region46: #{multi_head_attention.1} parent=1 // pred_check
      _
    $region47: #{multi_head_attention.1} parent=1 // pred_check_branch
      %93 = sbr.rel (0) target = $region49
    $region48: #{multi_head_attention.1} parent=1 // pred_region
      %94 = dma.done [#allocation9], 512
    $region49: #{multi_head_attention.1} parent=1 // pred_fallthru
      _
    %v95 = vld [vmem:[#allocation2] sm:$0xff]
    %v96 = vld [vmem:[#allocation2 + $0x8] sm:$0xff]
    %v97 = vld [vmem:[#allocation5] sm:$0xff]
    %v98 = vld [vmem:[#allocation5 + $0x8] sm:$0xff]
    %v99 = vld [vmem:[#allocation7] sm:$0xff]
    %v100 = vld [vmem:[#allocation7 + $0x8] sm:$0xff]
    %v101 = vld [vmem:[#allocation8] sm:$0xff]
    %v102 = vld [vmem:[#allocation8 + $0x8] sm:$0xff]
    %v103 = vld [vmem:[#allocation8 + $0x10] sm:$0xff]
    %v104 = vld [vmem:[#allocation8 + $0x18] sm:$0xff]
    %v105 = vld [vmem:[%s4] sm:$0x1]
    %v107 = vlaneseq
    %v108 = vshrl.u32 %v107, 7
    %v109 = vsub.s32 0, %v108
    %v110 = vrot.slane %v105, %v109
    %vm112 = vcmask 261120
    %v114 = vsel %vm112, %v95, 0
    %v117 = vsel %vm112, %v96, 0
    %119 = vmatprep.subr.mxu0 0.0
    %120 = vmatpush1.msra.mxu0 0.0
    %121 = vmatprep.subr.mxu0 0.0
    %122 = vmatpush1.msra.mxu0 0.0
    %123 = vmatprep.subr.mxu0 0.0
    %124 = vmatpush1.msra.mxu0 0.0
    %125 = vmatprep.subr.mxu0 0.0
    %126 = vmatpush1.msra.mxu0 0.0
    %127 = vmatprep.subr.mxu0 0.0
    %128 = vmatpush1.msra.mxu0 0.0
    %129 = vmatprep.subr.mxu0 0.0
    %130 = vmatpush1.msra.mxu0 0.0
    %131 = vmatprep.subr.mxu0 0.0
    %132 = vmatpush1.msra.mxu0 0.0
    %133 = vmatprep.subr.mxu0 0.0
    %134 = vmatpush1.msra.mxu0 0.0
    %135 = vmatprep.subr.mxu0 0.0
    %136 = vmatpush1.msra.mxu0 0.0
    %137 = vmatprep.subr.mxu0 0.0
    %138 = vmatpush1.msra.mxu0 0.0
    %139 = vmatprep.subr.mxu0 0.0
    %140 = vmatpush1.msra.mxu0 0.0
    %141 = vmatprep.subr.mxu0 0.0
    %142 = vmatpush1.msra.mxu0 0.0
    %143 = vmatprep.subr.mxu0 0.0
    %144 = vmatpush1.msra.mxu0 %v104
    %145 = vmatprep.subr.mxu0 0.0
    %146 = vmatpush1.msra.mxu0 %v103
    %147 = vmatprep.subr.mxu0 0.0
    %148 = vmatpush1.msra.mxu0 %v102
    %149 = vmatprep.subr.mxu0 0.0
    %150 = vmatpush1.msra.mxu0 %v101
    %151 = vmatprep.subr.mxu0 0.0
    %152 = vmatpush2.msra.mxu0 0.0
    %153 = vmatprep.subr.mxu0 0.0
    %154 = vmatpush2.msra.mxu0 0.0
    %155 = vmatprep.subr.mxu0 0.0
    %156 = vmatpush2.msra.mxu0 0.0
    %157 = vmatprep.subr.mxu0 0.0
    %158 = vmatpush2.msra.mxu0 0.0
    %159 = vmatprep.subr.mxu0 0.0
    %160 = vmatpush2.msra.mxu0 0.0
    %161 = vmatprep.subr.mxu0 0.0
    %162 = vmatpush2.msra.mxu0 0.0
    %163 = vmatprep.subr.mxu0 0.0
    %164 = vmatpush2.msra.mxu0 0.0
    %165 = vmatprep.subr.mxu0 0.0
    %166 = vmatpush2.msra.mxu0 0.0
    %167 = vmatprep.subr.mxu0 0.0
    %168 = vmatpush2.msra.mxu0 0.0
    %169 = vmatprep.subr.mxu0 0.0
    %170 = vmatpush2.msra.mxu0 0.0
    %171 = vmatprep.subr.mxu0 0.0
    %172 = vmatpush2.msra.mxu0 0.0
    %173 = vmatprep.subr.mxu0 0.0
    %174 = vmatpush2.msra.mxu0 0.0
    %175 = vmatprep.subr.mxu0 0.0
    %176 = vmatpush2.msra.mxu0 0.0
    %177 = vmatprep.subr.mxu0 0.0
    %178 = vmatpush2.msra.mxu0 0.0
    %179 = vmatprep.subr.mxu0 0.0
    %180 = vmatpush2.msra.mxu0 0.0
    %181 = vmatprep.subr.mxu0 0.0
    %182 = vmatpush2.msra.mxu0 0.0
    %183 = vmatprep.mubr.f32.mxu0 0.0
    %184 = vmatmul.mubr.f32.gmra.mxu0 %v114
    %v185 = vpop.f32.mrf.mxu0
    %v186 = vadd.f32 %v110, %v185
    %v187 = vpop.f32.mrf.mxu0
    %188 = vmatprep.mubr.f32.mxu0 0.0
    %189 = vmatmul.mubr.f32.gmra.mxu0 %v117
    %v190 = vpop.f32.mrf.mxu0
    %v191 = vadd.f32 %v110, %v190
    %v192 = vpop.f32.mrf.mxu0
    %193 = vdwg.mxu0
    %s194 = scalar_lea.vmem [#allocation8], 32
    %v195 = vld [vmem:[%s194] sm:$0xff]
    %v196 = vld [vmem:[%s194 + $0x8] sm:$0xff]
    %v197 = vld [vmem:[%s194 + $0x10] sm:$0xff]
    %v198 = vld [vmem:[%s194 + $0x18] sm:$0xff]
    %s199 = scalar_lea.vmem %s4, 1
    %v200 = vld [vmem:[%s199] sm:$0x1]
    %v202 = vlaneseq
    %v203 = vshrl.u32 %v202, 7
    %v204 = vsub.s32 0, %v203
    %v205 = vrot.slane %v200, %v204
    %v208 = vsel %vm112, %v97, 0
    %v211 = vsel %vm112, %v98, 0
    %213 = vmatprep.subr.mxu0 0.0
    %214 = vmatpush1.msra.mxu0 0.0
    %215 = vmatprep.subr.mxu0 0.0
    %216 = vmatpush1.msra.mxu0 0.0
    %217 = vmatprep.subr.mxu0 0.0
    %218 = vmatpush1.msra.mxu0 0.0
    %219 = vmatprep.subr.mxu0 0.0
    %220 = vmatpush1.msra.mxu0 0.0
    %221 = vmatprep.subr.mxu0 0.0
    %222 = vmatpush1.msra.mxu0 0.0
    %223 = vmatprep.subr.mxu0 0.0
    %224 = vmatpush1.msra.mxu0 0.0
    %225 = vmatprep.subr.mxu0 0.0
    %226 = vmatpush1.msra.mxu0 0.0
    %227 = vmatprep.subr.mxu0 0.0
    %228 = vmatpush1.msra.mxu0 0.0
    %229 = vmatprep.subr.mxu0 0.0
    %230 = vmatpush1.msra.mxu0 0.0
    %231 = vmatprep.subr.mxu0 0.0
    %232 = vmatpush1.msra.mxu0 0.0
    %233 = vmatprep.subr.mxu0 0.0
    %234 = vmatpush1.msra.mxu0 0.0
    %235 = vmatprep.subr.mxu0 0.0
    %236 = vmatpush1.msra.mxu0 0.0
    %237 = vmatprep.subr.mxu0 0.0
    %238 = vmatpush1.msra.mxu0 %v198
    %239 = vmatprep.subr.mxu0 0.0
    %240 = vmatpush1.msra.mxu0 %v197
    %241 = vmatprep.subr.mxu0 0.0
    %242 = vmatpush1.msra.mxu0 %v196
    %243 = vmatprep.subr.mxu0 0.0
    %244 = vmatpush1.msra.mxu0 %v195
    %245 = vmatprep.subr.mxu0 0.0
    %246 = vmatpush2.msra.mxu0 0.0
    %247 = vmatprep.subr.mxu0 0.0
    %248 = vmatpush2.msra.mxu0 0.0
    %249 = vmatprep.subr.mxu0 0.0
    %250 = vmatpush2.msra.mxu0 0.0
    %251 = vmatprep.subr.mxu0 0.0
    %252 = vmatpush2.msra.mxu0 0.0
    %253 = vmatprep.subr.mxu0 0.0
    %254 = vmatpush2.msra.mxu0 0.0
    %255 = vmatprep.subr.mxu0 0.0
    %256 = vmatpush2.msra.mxu0 0.0
    %257 = vmatprep.subr.mxu0 0.0
    %258 = vmatpush2.msra.mxu0 0.0
    %259 = vmatprep.subr.mxu0 0.0
    %260 = vmatpush2.msra.mxu0 0.0
    %261 = vmatprep.subr.mxu0 0.0
    %262 = vmatpush2.msra.mxu0 0.0
    %263 = vmatprep.subr.mxu0 0.0
    %264 = vmatpush2.msra.mxu0 0.0
    %265 = vmatprep.subr.mxu0 0.0
    %266 = vmatpush2.msra.mxu0 0.0
    %267 = vmatprep.subr.mxu0 0.0
    %268 = vmatpush2.msra.mxu0 0.0
    %269 = vmatprep.subr.mxu0 0.0
    %270 = vmatpush2.msra.mxu0 0.0
    %271 = vmatprep.subr.mxu0 0.0
    %272 = vmatpush2.msra.mxu0 0.0
    %273 = vmatprep.subr.mxu0 0.0
    %274 = vmatpush2.msra.mxu0 0.0
    %275 = vmatprep.subr.mxu0 0.0
    %276 = vmatpush2.msra.mxu0 0.0
    %277 = vmatprep.mubr.f32.mxu0 0.0
    %278 = vmatmul.mubr.f32.gmra.mxu0 %v208
    %v279 = vpop.f32.mrf.mxu0
    %v280 = vadd.f32 %v205, %v279
    %v281 = vpop.f32.mrf.mxu0
    %282 = vmatprep.mubr.f32.mxu0 0.0
    %283 = vmatmul.mubr.f32.gmra.mxu0 %v211
    %v284 = vpop.f32.mrf.mxu0
    %v285 = vadd.f32 %v205, %v284
    %v286 = vpop.f32.mrf.mxu0
    %287 = vdwg.mxu0
    %s288 = scalar_lea.vmem [#allocation8], 64
    %v289 = vld [vmem:[%s288] sm:$0xff]
    %v290 = vld [vmem:[%s288 + $0x8] sm:$0xff]
    %v291 = vld [vmem:[%s288 + $0x10] sm:$0xff]
    %v292 = vld [vmem:[%s288 + $0x18] sm:$0xff]
    %s293 = scalar_lea.vmem %s4, 2
    %v294 = vld [vmem:[%s293] sm:$0x1]
    %v296 = vlaneseq
    %v297 = vshrl.u32 %v296, 7
    %v298 = vsub.s32 0, %v297
    %v299 = vrot.slane %v294, %v298
    %v302 = vsel %vm112, %v99, 0
    %v305 = vsel %vm112, %v100, 0
    %307 = vmatprep.subr.mxu0 0.0
    %308 = vmatpush1.msra.mxu0 0.0
    %309 = vmatprep.subr.mxu0 0.0
    %310 = vmatpush1.msra.mxu0 0.0
    %311 = vmatprep.subr.mxu0 0.0
    %312 = vmatpush1.msra.mxu0 0.0
    %313 = vmatprep.subr.mxu0 0.0
    %314 = vmatpush1.msra.mxu0 0.0
    %315 = vmatprep.subr.mxu0 0.0
    %316 = vmatpush1.msra.mxu0 0.0
    %317 = vmatprep.subr.mxu0 0.0
    %318 = vmatpush1.msra.mxu0 0.0
    %319 = vmatprep.subr.mxu0 0.0
    %320 = vmatpush1.msra.mxu0 0.0
    %321 = vmatprep.subr.mxu0 0.0
    %322 = vmatpush1.msra.mxu0 0.0
    %323 = vmatprep.subr.mxu0 0.0
    %324 = vmatpush1.msra.mxu0 0.0
    %325 = vmatprep.subr.mxu0 0.0
    %326 = vmatpush1.msra.mxu0 0.0
    %327 = vmatprep.subr.mxu0 0.0
    %328 = vmatpush1.msra.mxu0 0.0
    %329 = vmatprep.subr.mxu0 0.0
    %330 = vmatpush1.msra.mxu0 0.0
    %331 = vmatprep.subr.mxu0 0.0
    %332 = vmatpush1.msra.mxu0 %v292
    %333 = vmatprep.subr.mxu0 0.0
    %334 = vmatpush1.msra.mxu0 %v291
    %335 = vmatprep.subr.mxu0 0.0
    %336 = vmatpush1.msra.mxu0 %v290
    %337 = vmatprep.subr.mxu0 0.0
    %338 = vmatpush1.msra.mxu0 %v289
    %339 = vmatprep.subr.mxu0 0.0
    %340 = vmatpush2.msra.mxu0 0.0
    %341 = vmatprep.subr.mxu0 0.0
    %342 = vmatpush2.msra.mxu0 0.0
    %343 = vmatprep.subr.mxu0 0.0
    %344 = vmatpush2.msra.mxu0 0.0
    %345 = vmatprep.subr.mxu0 0.0
    %346 = vmatpush2.msra.mxu0 0.0
    %347 = vmatprep.subr.mxu0 0.0
    %348 = vmatpush2.msra.mxu0 0.0
    %349 = vmatprep.subr.mxu0 0.0
    %350 = vmatpush2.msra.mxu0 0.0
    %351 = vmatprep.subr.mxu0 0.0
    %352 = vmatpush2.msra.mxu0 0.0
    %353 = vmatprep.subr.mxu0 0.0
    %354 = vmatpush2.msra.mxu0 0.0
    %355 = vmatprep.subr.mxu0 0.0
    %356 = vmatpush2.msra.mxu0 0.0
    %357 = vmatprep.subr.mxu0 0.0
    %358 = vmatpush2.msra.mxu0 0.0
    %359 = vmatprep.subr.mxu0 0.0
    %360 = vmatpush2.msra.mxu0 0.0
    %361 = vmatprep.subr.mxu0 0.0
    %362 = vmatpush2.msra.mxu0 0.0
    %363 = vmatprep.subr.mxu0 0.0
    %364 = vmatpush2.msra.mxu0 0.0
    %365 = vmatprep.subr.mxu0 0.0
    %366 = vmatpush2.msra.mxu0 0.0
    %367 = vmatprep.subr.mxu0 0.0
    %368 = vmatpush2.msra.mxu0 0.0
    %369 = vmatprep.subr.mxu0 0.0
    %370 = vmatpush2.msra.mxu0 0.0
    %371 = vmatprep.mubr.f32.mxu0 0.0
    %372 = vmatmul.mubr.f32.gmra.mxu0 %v302
    %v373 = vpop.f32.mrf.mxu0
    %v374 = vadd.f32 %v299, %v373
    %v375 = vpop.f32.mrf.mxu0
    %376 = vmatprep.mubr.f32.mxu0 0.0
    %377 = vmatmul.mubr.f32.gmra.mxu0 %v305
    %v378 = vpop.f32.mrf.mxu0
    %v379 = vadd.f32 %v299, %v378
    %v380 = vpop.f32.mrf.mxu0
    %381 = vdwg.mxu0
    %384 = vrot.lane.b32.xlu0 %v186, 120
    %v385 = vpop.permute.xlu0 %384
    %386 = vrot.lane.b32.xlu0 %v191, 120
    %v387 = vpop.permute.xlu0 %386
    %388 = vrot.lane.b32.xlu0 %v186, 112
    %v389 = vpop.permute.xlu0 %388
    %390 = vrot.lane.b32.xlu0 %v191, 112
    %v391 = vpop.permute.xlu0 %390
    %392 = vrot.lane.b32.xlu0 %v186, 104
    %v393 = vpop.permute.xlu0 %392
    %394 = vrot.lane.b32.xlu0 %v191, 104
    %v395 = vpop.permute.xlu0 %394
    %398 = vrot.lane.b32.xlu0 %v280, 120
    %v399 = vpop.permute.xlu0 %398
    %400 = vrot.lane.b32.xlu0 %v285, 120
    %v401 = vpop.permute.xlu0 %400
    %402 = vrot.lane.b32.xlu0 %v280, 112
    %v403 = vpop.permute.xlu0 %402
    %404 = vrot.lane.b32.xlu0 %v285, 112
    %v405 = vpop.permute.xlu0 %404
    %406 = vrot.lane.b32.xlu0 %v280, 104
    %v407 = vpop.permute.xlu0 %406
    %408 = vrot.lane.b32.xlu0 %v285, 104
    %v409 = vpop.permute.xlu0 %408
    %412 = vrot.lane.b32.xlu0 %v374, 120
    %v413 = vpop.permute.xlu0 %412
    %414 = vrot.lane.b32.xlu0 %v379, 120
    %v415 = vpop.permute.xlu0 %414
    %418 = vrot.lane.b32.xlu0 %v374, 112
    %v419 = vpop.permute.xlu0 %418
    %420 = vrot.lane.b32.xlu0 %v379, 112
    %v421 = vpop.permute.xlu0 %420
    %424 = vrot.lane.b32.xlu0 %v374, 104
    %v425 = vpop.permute.xlu0 %424
    %426 = vrot.lane.b32.xlu0 %v379, 104
    %v427 = vpop.permute.xlu0 %426
    %vm430 = vcmask 64512
    %v431 = vsel %vm430, %v186, 0
    %v433 = vsel %vm430, %v280, 0
    %435 = vmatprep.subr.mxu0 0.0
    %436 = vmatpush1.xpose.msra.mxu0 0.0
    %437 = vmatprep.subr.mxu0 0.0
    %438 = vmatpush1.xpose.msra.mxu0 0.0
    %439 = vmatprep.subr.mxu0 0.0
    %440 = vmatpush1.xpose.msra.mxu0 0.0
    %441 = vmatprep.subr.mxu0 0.0
    %442 = vmatpush1.xpose.msra.mxu0 0.0
    %443 = vmatprep.subr.mxu0 0.0
    %444 = vmatpush1.xpose.msra.mxu0 0.0
    %445 = vmatprep.subr.mxu0 0.0
    %446 = vmatpush1.xpose.msra.mxu0 0.0
    %447 = vmatprep.subr.mxu0 0.0
    %448 = vmatpush1.xpose.msra.mxu0 0.0
    %449 = vmatprep.subr.mxu0 0.0
    %450 = vmatpush1.xpose.msra.mxu0 0.0
    %451 = vmatprep.subr.mxu0 0.0
    %452 = vmatpush1.xpose.msra.mxu0 0.0
    %453 = vmatprep.subr.mxu0 0.0
    %454 = vmatpush1.xpose.msra.mxu0 0.0
    %455 = vmatprep.subr.mxu0 0.0
    %456 = vmatpush1.xpose.msra.mxu0 0.0
    %457 = vmatprep.subr.mxu0 0.0
    %458 = vmatpush1.xpose.msra.mxu0 0.0
    %459 = vmatprep.subr.mxu0 0.0
    %460 = vmatpush1.xpose.msra.mxu0 0.0
    %461 = vmatprep.subr.mxu0 0.0
    %462 = vmatpush1.xpose.msra.mxu0 0.0
    %463 = vmatprep.subr.mxu0 0.0
    %464 = vmatpush1.xpose.msra.mxu0 0.0
    %465 = vmatprep.subr.mxu0 0.0
    %466 = vmatpush1.xpose.msra.mxu0 %v433
    %467 = vmatprep.subr.mxu0 0.0
    %468 = vmatpush2.xpose.msra.mxu0 0.0
    %469 = vmatprep.subr.mxu0 0.0
    %470 = vmatpush2.xpose.msra.mxu0 0.0
    %471 = vmatprep.subr.mxu0 0.0
    %472 = vmatpush2.xpose.msra.mxu0 0.0
    %473 = vmatprep.subr.mxu0 0.0
    %474 = vmatpush2.xpose.msra.mxu0 0.0
    %475 = vmatprep.subr.mxu0 0.0
    %476 = vmatpush2.xpose.msra.mxu0 0.0
    %477 = vmatprep.subr.mxu0 0.0
    %478 = vmatpush2.xpose.msra.mxu0 0.0
    %479 = vmatprep.subr.mxu0 0.0
    %480 = vmatpush2.xpose.msra.mxu0 0.0
    %481 = vmatprep.subr.mxu0 0.0
    %482 = vmatpush2.xpose.msra.mxu0 0.0
    %483 = vmatprep.subr.mxu0 0.0
    %484 = vmatpush2.xpose.msra.mxu0 0.0
    %485 = vmatprep.subr.mxu0 0.0
    %486 = vmatpush2.xpose.msra.mxu0 0.0
    %487 = vmatprep.subr.mxu0 0.0
    %488 = vmatpush2.xpose.msra.mxu0 0.0
    %489 = vmatprep.subr.mxu0 0.0
    %490 = vmatpush2.xpose.msra.mxu0 0.0
    %491 = vmatprep.subr.mxu0 0.0
    %492 = vmatpush2.xpose.msra.mxu0 0.0
    %493 = vmatprep.subr.mxu0 0.0
    %494 = vmatpush2.xpose.msra.mxu0 0.0
    %495 = vmatprep.subr.mxu0 0.0
    %496 = vmatpush2.xpose.msra.mxu0 0.0
    %497 = vmatprep.subr.mxu0 0.0
    %498 = vmatpush2.xpose.msra.mxu0 0.0
    %499 = vmatprep.mubr.f32.mxu0 0.0
    %500 = vmatmul.mubr.f32.gmra.mxu0 %v431
    %v501 = vpop.f32.mrf.mxu0
    %v502 = vadd.f32 0.0, %v501
    %v503 = vpop.f32.mrf.mxu0
    %504 = vdwg.mxu0
    %v505 = vsel %vm430, %v191, 0
    %v507 = vsel %vm430, %v285, 0
    %509 = vmatprep.subr.mxu0 0.0
    %510 = vmatpush1.xpose.msra.mxu0 0.0
    %511 = vmatprep.subr.mxu0 0.0
    %512 = vmatpush1.xpose.msra.mxu0 0.0
    %513 = vmatprep.subr.mxu0 0.0
    %514 = vmatpush1.xpose.msra.mxu0 0.0
    %515 = vmatprep.subr.mxu0 0.0
    %516 = vmatpush1.xpose.msra.mxu0 0.0
    %517 = vmatprep.subr.mxu0 0.0
    %518 = vmatpush1.xpose.msra.mxu0 0.0
    %519 = vmatprep.subr.mxu0 0.0
    %520 = vmatpush1.xpose.msra.mxu0 0.0
    %521 = vmatprep.subr.mxu0 0.0
    %522 = vmatpush1.xpose.msra.mxu0 0.0
    %523 = vmatprep.subr.mxu0 0.0
    %524 = vmatpush1.xpose.msra.mxu0 0.0
    %525 = vmatprep.subr.mxu0 0.0
    %526 = vmatpush1.xpose.msra.mxu0 0.0
    %527 = vmatprep.subr.mxu0 0.0
    %528 = vmatpush1.xpose.msra.mxu0 0.0
    %529 = vmatprep.subr.mxu0 0.0
    %530 = vmatpush1.xpose.msra.mxu0 0.0
    %531 = vmatprep.subr.mxu0 0.0
    %532 = vmatpush1.xpose.msra.mxu0 0.0
    %533 = vmatprep.subr.mxu0 0.0
    %534 = vmatpush1.xpose.msra.mxu0 0.0
    %535 = vmatprep.subr.mxu0 0.0
    %536 = vmatpush1.xpose.msra.mxu0 0.0
    %537 = vmatprep.subr.mxu0 0.0
    %538 = vmatpush1.xpose.msra.mxu0 0.0
    %539 = vmatprep.subr.mxu0 0.0
    %540 = vmatpush1.xpose.msra.mxu0 %v507
    %541 = vmatprep.subr.mxu0 0.0
    %542 = vmatpush2.xpose.msra.mxu0 0.0
    %543 = vmatprep.subr.mxu0 0.0
    %544 = vmatpush2.xpose.msra.mxu0 0.0
    %545 = vmatprep.subr.mxu0 0.0
    %546 = vmatpush2.xpose.msra.mxu0 0.0
    %547 = vmatprep.subr.mxu0 0.0
    %548 = vmatpush2.xpose.msra.mxu0 0.0
    %549 = vmatprep.subr.mxu0 0.0
    %550 = vmatpush2.xpose.msra.mxu0 0.0
    %551 = vmatprep.subr.mxu0 0.0
    %552 = vmatpush2.xpose.msra.mxu0 0.0
    %553 = vmatprep.subr.mxu0 0.0
    %554 = vmatpush2.xpose.msra.mxu0 0.0
    %555 = vmatprep.subr.mxu0 0.0
    %556 = vmatpush2.xpose.msra.mxu0 0.0
    %557 = vmatprep.subr.mxu0 0.0
    %558 = vmatpush2.xpose.msra.mxu0 0.0
    %559 = vmatprep.subr.mxu0 0.0
    %560 = vmatpush2.xpose.msra.mxu0 0.0
    %561 = vmatprep.subr.mxu0 0.0
    %562 = vmatpush2.xpose.msra.mxu0 0.0
    %563 = vmatprep.subr.mxu0 0.0
    %564 = vmatpush2.xpose.msra.mxu0 0.0
    %565 = vmatprep.subr.mxu0 0.0
    %566 = vmatpush2.xpose.msra.mxu0 0.0
    %567 = vmatprep.subr.mxu0 0.0
    %568 = vmatpush2.xpose.msra.mxu0 0.0
    %569 = vmatprep.subr.mxu0 0.0
    %570 = vmatpush2.xpose.msra.mxu0 0.0
    %571 = vmatprep.subr.mxu0 0.0
    %572 = vmatpush2.xpose.msra.mxu0 0.0
    %573 = vmatprep.mubr.f32.mxu0 0.0
    %574 = vmatmul.mubr.f32.gmra.mxu0 %v505
    %v575 = vpop.f32.mrf.mxu0
    %v576 = vadd.f32 0.0, %v575
    %v577 = vpop.f32.mrf.mxu0
    %578 = vdwg.mxu0
    %v579 = vsel %vm430, %v385, 0
    %v581 = vsel %vm430, %v399, 0
    %583 = vmatprep.subr.mxu0 0.0
    %584 = vmatpush1.xpose.msra.mxu0 0.0
    %585 = vmatprep.subr.mxu0 0.0
    %586 = vmatpush1.xpose.msra.mxu0 0.0
    %587 = vmatprep.subr.mxu0 0.0
    %588 = vmatpush1.xpose.msra.mxu0 0.0
    %589 = vmatprep.subr.mxu0 0.0
    %590 = vmatpush1.xpose.msra.mxu0 0.0
    %591 = vmatprep.subr.mxu0 0.0
    %592 = vmatpush1.xpose.msra.mxu0 0.0
    %593 = vmatprep.subr.mxu0 0.0
    %594 = vmatpush1.xpose.msra.mxu0 0.0
    %595 = vmatprep.subr.mxu0 0.0
    %596 = vmatpush1.xpose.msra.mxu0 0.0
    %597 = vmatprep.subr.mxu0 0.0
    %598 = vmatpush1.xpose.msra.mxu0 0.0
    %599 = vmatprep.subr.mxu0 0.0
    %600 = vmatpush1.xpose.msra.mxu0 0.0
    %601 = vmatprep.subr.mxu0 0.0
    %602 = vmatpush1.xpose.msra.mxu0 0.0
    %603 = vmatprep.subr.mxu0 0.0
    %604 = vmatpush1.xpose.msra.mxu0 0.0
    %605 = vmatprep.subr.mxu0 0.0
    %606 = vmatpush1.xpose.msra.mxu0 0.0
    %607 = vmatprep.subr.mxu0 0.0
    %608 = vmatpush1.xpose.msra.mxu0 0.0
    %609 = vmatprep.subr.mxu0 0.0
    %610 = vmatpush1.xpose.msra.mxu0 0.0
    %611 = vmatprep.subr.mxu0 0.0
    %612 = vmatpush1.xpose.msra.mxu0 0.0
    %613 = vmatprep.subr.mxu0 0.0
    %614 = vmatpush1.xpose.msra.mxu0 %v581
    %615 = vmatprep.subr.mxu0 0.0
    %616 = vmatpush2.xpose.msra.mxu0 0.0
    %617 = vmatprep.subr.mxu0 0.0
    %618 = vmatpush2.xpose.msra.mxu0 0.0
    %619 = vmatprep.subr.mxu0 0.0
    %620 = vmatpush2.xpose.msra.mxu0 0.0
    %621 = vmatprep.subr.mxu0 0.0
    %622 = vmatpush2.xpose.msra.mxu0 0.0
    %623 = vmatprep.subr.mxu0 0.0
    %624 = vmatpush2.xpose.msra.mxu0 0.0
    %625 = vmatprep.subr.mxu0 0.0
    %626 = vmatpush2.xpose.msra.mxu0 0.0
    %627 = vmatprep.subr.mxu0 0.0
    %628 = vmatpush2.xpose.msra.mxu0 0.0
    %629 = vmatprep.subr.mxu0 0.0
    %630 = vmatpush2.xpose.msra.mxu0 0.0
    %631 = vmatprep.subr.mxu0 0.0
    %632 = vmatpush2.xpose.msra.mxu0 0.0
    %633 = vmatprep.subr.mxu0 0.0
    %634 = vmatpush2.xpose.msra.mxu0 0.0
    %635 = vmatprep.subr.mxu0 0.0
    %636 = vmatpush2.xpose.msra.mxu0 0.0
    %637 = vmatprep.subr.mxu0 0.0
    %638 = vmatpush2.xpose.msra.mxu0 0.0
    %639 = vmatprep.subr.mxu0 0.0
    %640 = vmatpush2.xpose.msra.mxu0 0.0
    %641 = vmatprep.subr.mxu0 0.0
    %642 = vmatpush2.xpose.msra.mxu0 0.0
    %643 = vmatprep.subr.mxu0 0.0
    %644 = vmatpush2.xpose.msra.mxu0 0.0
    %645 = vmatprep.subr.mxu0 0.0
    %646 = vmatpush2.xpose.msra.mxu0 0.0
    %647 = vmatprep.mubr.f32.mxu0 0.0
    %648 = vmatmul.mubr.f32.gmra.mxu0 %v579
    %v649 = vpop.f32.mrf.mxu0
    %v650 = vadd.f32 0.0, %v649
    %v651 = vpop.f32.mrf.mxu0
    %652 = vdwg.mxu0
    %v653 = vsel %vm430, %v387, 0
    %v655 = vsel %vm430, %v401, 0
    %657 = vmatprep.subr.mxu0 0.0
    %658 = vmatpush1.xpose.msra.mxu0 0.0
    %659 = vmatprep.subr.mxu0 0.0
    %660 = vmatpush1.xpose.msra.mxu0 0.0
    %661 = vmatprep.subr.mxu0 0.0
    %662 = vmatpush1.xpose.msra.mxu0 0.0
    %663 = vmatprep.subr.mxu0 0.0
    %664 = vmatpush1.xpose.msra.mxu0 0.0
    %665 = vmatprep.subr.mxu0 0.0
    %666 = vmatpush1.xpose.msra.mxu0 0.0
    %667 = vmatprep.subr.mxu0 0.0
    %668 = vmatpush1.xpose.msra.mxu0 0.0
    %669 = vmatprep.subr.mxu0 0.0
    %670 = vmatpush1.xpose.msra.mxu0 0.0
    %671 = vmatprep.subr.mxu0 0.0
    %672 = vmatpush1.xpose.msra.mxu0 0.0
    %673 = vmatprep.subr.mxu0 0.0
    %674 = vmatpush1.xpose.msra.mxu0 0.0
    %675 = vmatprep.subr.mxu0 0.0
    %676 = vmatpush1.xpose.msra.mxu0 0.0
    %677 = vmatprep.subr.mxu0 0.0
    %678 = vmatpush1.xpose.msra.mxu0 0.0
    %679 = vmatprep.subr.mxu0 0.0
    %680 = vmatpush1.xpose.msra.mxu0 0.0
    %681 = vmatprep.subr.mxu0 0.0
    %682 = vmatpush1.xpose.msra.mxu0 0.0
    %683 = vmatprep.subr.mxu0 0.0
    %684 = vmatpush1.xpose.msra.mxu0 0.0
    %685 = vmatprep.subr.mxu0 0.0
    %686 = vmatpush1.xpose.msra.mxu0 0.0
    %687 = vmatprep.subr.mxu0 0.0
    %688 = vmatpush1.xpose.msra.mxu0 %v655
    %689 = vmatprep.subr.mxu0 0.0
    %690 = vmatpush2.xpose.msra.mxu0 0.0
    %691 = vmatprep.subr.mxu0 0.0
    %692 = vmatpush2.xpose.msra.mxu0 0.0
    %693 = vmatprep.subr.mxu0 0.0
    %694 = vmatpush2.xpose.msra.mxu0 0.0
    %695 = vmatprep.subr.mxu0 0.0
    %696 = vmatpush2.xpose.msra.mxu0 0.0
    %697 = vmatprep.subr.mxu0 0.0
    %698 = vmatpush2.xpose.msra.mxu0 0.0
    %699 = vmatprep.subr.mxu0 0.0
    %700 = vmatpush2.xpose.msra.mxu0 0.0
    %701 = vmatprep.subr.mxu0 0.0
    %702 = vmatpush2.xpose.msra.mxu0 0.0
    %703 = vmatprep.subr.mxu0 0.0
    %704 = vmatpush2.xpose.msra.mxu0 0.0
    %705 = vmatprep.subr.mxu0 0.0
    %706 = vmatpush2.xpose.msra.mxu0 0.0
    %707 = vmatprep.subr.mxu0 0.0
    %708 = vmatpush2.xpose.msra.mxu0 0.0
    %709 = vmatprep.subr.mxu0 0.0
    %710 = vmatpush2.xpose.msra.mxu0 0.0
    %711 = vmatprep.subr.mxu0 0.0
    %712 = vmatpush2.xpose.msra.mxu0 0.0
    %713 = vmatprep.subr.mxu0 0.0
    %714 = vmatpush2.xpose.msra.mxu0 0.0
    %715 = vmatprep.subr.mxu0 0.0
    %716 = vmatpush2.xpose.msra.mxu0 0.0
    %717 = vmatprep.subr.mxu0 0.0
    %718 = vmatpush2.xpose.msra.mxu0 0.0
    %719 = vmatprep.subr.mxu0 0.0
    %720 = vmatpush2.xpose.msra.mxu0 0.0
    %721 = vmatprep.mubr.f32.mxu0 0.0
    %722 = vmatmul.mubr.f32.gmra.mxu0 %v653
    %v723 = vpop.f32.mrf.mxu0
    %v724 = vadd.f32 0.0, %v723
    %v725 = vpop.f32.mrf.mxu0
    %726 = vdwg.mxu0
    %v727 = vsel %vm430, %v389, 0
    %v729 = vsel %vm430, %v403, 0
    %731 = vmatprep.subr.mxu0 0.0
    %732 = vmatpush1.xpose.msra.mxu0 0.0
    %733 = vmatprep.subr.mxu0 0.0
    %734 = vmatpush1.xpose.msra.mxu0 0.0
    %735 = vmatprep.subr.mxu0 0.0
    %736 = vmatpush1.xpose.msra.mxu0 0.0
    %737 = vmatprep.subr.mxu0 0.0
    %738 = vmatpush1.xpose.msra.mxu0 0.0
    %739 = vmatprep.subr.mxu0 0.0
    %740 = vmatpush1.xpose.msra.mxu0 0.0
    %741 = vmatprep.subr.mxu0 0.0
    %742 = vmatpush1.xpose.msra.mxu0 0.0
    %743 = vmatprep.subr.mxu0 0.0
    %744 = vmatpush1.xpose.msra.mxu0 0.0
    %745 = vmatprep.subr.mxu0 0.0
    %746 = vmatpush1.xpose.msra.mxu0 0.0
    %747 = vmatprep.subr.mxu0 0.0
    %748 = vmatpush1.xpose.msra.mxu0 0.0
    %749 = vmatprep.subr.mxu0 0.0
    %750 = vmatpush1.xpose.msra.mxu0 0.0
    %751 = vmatprep.subr.mxu0 0.0
    %752 = vmatpush1.xpose.msra.mxu0 0.0
    %753 = vmatprep.subr.mxu0 0.0
    %754 = vmatpush1.xpose.msra.mxu0 0.0
    %755 = vmatprep.subr.mxu0 0.0
    %756 = vmatpush1.xpose.msra.mxu0 0.0
    %757 = vmatprep.subr.mxu0 0.0
    %758 = vmatpush1.xpose.msra.mxu0 0.0
    %759 = vmatprep.subr.mxu0 0.0
    %760 = vmatpush1.xpose.msra.mxu0 0.0
    %761 = vmatprep.subr.mxu0 0.0
    %762 = vmatpush1.xpose.msra.mxu0 %v729
    %763 = vmatprep.subr.mxu0 0.0
    %764 = vmatpush2.xpose.msra.mxu0 0.0
    %765 = vmatprep.subr.mxu0 0.0
    %766 = vmatpush2.xpose.msra.mxu0 0.0
    %767 = vmatprep.subr.mxu0 0.0
    %768 = vmatpush2.xpose.msra.mxu0 0.0
    %769 = vmatprep.subr.mxu0 0.0
    %770 = vmatpush2.xpose.msra.mxu0 0.0
    %771 = vmatprep.subr.mxu0 0.0
    %772 = vmatpush2.xpose.msra.mxu0 0.0
    %773 = vmatprep.subr.mxu0 0.0
    %774 = vmatpush2.xpose.msra.mxu0 0.0
    %775 = vmatprep.subr.mxu0 0.0
    %776 = vmatpush2.xpose.msra.mxu0 0.0
    %777 = vmatprep.subr.mxu0 0.0
    %778 = vmatpush2.xpose.msra.mxu0 0.0
    %779 = vmatprep.subr.mxu0 0.0
    %780 = vmatpush2.xpose.msra.mxu0 0.0
    %781 = vmatprep.subr.mxu0 0.0
    %782 = vmatpush2.xpose.msra.mxu0 0.0
    %783 = vmatprep.subr.mxu0 0.0
    %784 = vmatpush2.xpose.msra.mxu0 0.0
    %785 = vmatprep.subr.mxu0 0.0
    %786 = vmatpush2.xpose.msra.mxu0 0.0
    %787 = vmatprep.subr.mxu0 0.0
    %788 = vmatpush2.xpose.msra.mxu0 0.0
    %789 = vmatprep.subr.mxu0 0.0
    %790 = vmatpush2.xpose.msra.mxu0 0.0
    %791 = vmatprep.subr.mxu0 0.0
    %792 = vmatpush2.xpose.msra.mxu0 0.0
    %793 = vmatprep.subr.mxu0 0.0
    %794 = vmatpush2.xpose.msra.mxu0 0.0
    %795 = vmatprep.mubr.f32.mxu0 0.0
    %796 = vmatmul.mubr.f32.gmra.mxu0 %v727
    %v797 = vpop.f32.mrf.mxu0
    %v798 = vadd.f32 0.0, %v797
    %v799 = vpop.f32.mrf.mxu0
    %800 = vdwg.mxu0
    %v801 = vsel %vm430, %v391, 0
    %v803 = vsel %vm430, %v405, 0
    %805 = vmatprep.subr.mxu0 0.0
    %806 = vmatpush1.xpose.msra.mxu0 0.0
    %807 = vmatprep.subr.mxu0 0.0
    %808 = vmatpush1.xpose.msra.mxu0 0.0
    %809 = vmatprep.subr.mxu0 0.0
    %810 = vmatpush1.xpose.msra.mxu0 0.0
    %811 = vmatprep.subr.mxu0 0.0
    %812 = vmatpush1.xpose.msra.mxu0 0.0
    %813 = vmatprep.subr.mxu0 0.0
    %814 = vmatpush1.xpose.msra.mxu0 0.0
    %815 = vmatprep.subr.mxu0 0.0
    %816 = vmatpush1.xpose.msra.mxu0 0.0
    %817 = vmatprep.subr.mxu0 0.0
    %818 = vmatpush1.xpose.msra.mxu0 0.0
    %819 = vmatprep.subr.mxu0 0.0
    %820 = vmatpush1.xpose.msra.mxu0 0.0
    %821 = vmatprep.subr.mxu0 0.0
    %822 = vmatpush1.xpose.msra.mxu0 0.0
    %823 = vmatprep.subr.mxu0 0.0
    %824 = vmatpush1.xpose.msra.mxu0 0.0
    %825 = vmatprep.subr.mxu0 0.0
    %826 = vmatpush1.xpose.msra.mxu0 0.0
    %827 = vmatprep.subr.mxu0 0.0
    %828 = vmatpush1.xpose.msra.mxu0 0.0
    %829 = vmatprep.subr.mxu0 0.0
    %830 = vmatpush1.xpose.msra.mxu0 0.0
    %831 = vmatprep.subr.mxu0 0.0
    %832 = vmatpush1.xpose.msra.mxu0 0.0
    %833 = vmatprep.subr.mxu0 0.0
    %834 = vmatpush1.xpose.msra.mxu0 0.0
    %835 = vmatprep.subr.mxu0 0.0
    %836 = vmatpush1.xpose.msra.mxu0 %v803
    %837 = vmatprep.subr.mxu0 0.0
    %838 = vmatpush2.xpose.msra.mxu0 0.0
    %839 = vmatprep.subr.mxu0 0.0
    %840 = vmatpush2.xpose.msra.mxu0 0.0
    %841 = vmatprep.subr.mxu0 0.0
    %842 = vmatpush2.xpose.msra.mxu0 0.0
    %843 = vmatprep.subr.mxu0 0.0
    %844 = vmatpush2.xpose.msra.mxu0 0.0
    %845 = vmatprep.subr.mxu0 0.0
    %846 = vmatpush2.xpose.msra.mxu0 0.0
    %847 = vmatprep.subr.mxu0 0.0
    %848 = vmatpush2.xpose.msra.mxu0 0.0
    %849 = vmatprep.subr.mxu0 0.0
    %850 = vmatpush2.xpose.msra.mxu0 0.0
    %851 = vmatprep.subr.mxu0 0.0
    %852 = vmatpush2.xpose.msra.mxu0 0.0
    %853 = vmatprep.subr.mxu0 0.0
    %854 = vmatpush2.xpose.msra.mxu0 0.0
    %855 = vmatprep.subr.mxu0 0.0
    %856 = vmatpush2.xpose.msra.mxu0 0.0
    %857 = vmatprep.subr.mxu0 0.0
    %858 = vmatpush2.xpose.msra.mxu0 0.0
    %859 = vmatprep.subr.mxu0 0.0
    %860 = vmatpush2.xpose.msra.mxu0 0.0
    %861 = vmatprep.subr.mxu0 0.0
    %862 = vmatpush2.xpose.msra.mxu0 0.0
    %863 = vmatprep.subr.mxu0 0.0
    %864 = vmatpush2.xpose.msra.mxu0 0.0
    %865 = vmatprep.subr.mxu0 0.0
    %866 = vmatpush2.xpose.msra.mxu0 0.0
    %867 = vmatprep.subr.mxu0 0.0
    %868 = vmatpush2.xpose.msra.mxu0 0.0
    %869 = vmatprep.mubr.f32.mxu0 0.0
    %870 = vmatmul.mubr.f32.gmra.mxu0 %v801
    %v871 = vpop.f32.mrf.mxu0
    %v872 = vadd.f32 0.0, %v871
    %v873 = vpop.f32.mrf.mxu0
    %874 = vdwg.mxu0
    %v875 = vsel %vm430, %v393, 0
    %v877 = vsel %vm430, %v407, 0
    %879 = vmatprep.subr.mxu0 0.0
    %880 = vmatpush1.xpose.msra.mxu0 0.0
    %881 = vmatprep.subr.mxu0 0.0
    %882 = vmatpush1.xpose.msra.mxu0 0.0
    %883 = vmatprep.subr.mxu0 0.0
    %884 = vmatpush1.xpose.msra.mxu0 0.0
    %885 = vmatprep.subr.mxu0 0.0
    %886 = vmatpush1.xpose.msra.mxu0 0.0
    %887 = vmatprep.subr.mxu0 0.0
    %888 = vmatpush1.xpose.msra.mxu0 0.0
    %889 = vmatprep.subr.mxu0 0.0
    %890 = vmatpush1.xpose.msra.mxu0 0.0
    %891 = vmatprep.subr.mxu0 0.0
    %892 = vmatpush1.xpose.msra.mxu0 0.0
    %893 = vmatprep.subr.mxu0 0.0
    %894 = vmatpush1.xpose.msra.mxu0 0.0
    %895 = vmatprep.subr.mxu0 0.0
    %896 = vmatpush1.xpose.msra.mxu0 0.0
    %897 = vmatprep.subr.mxu0 0.0
    %898 = vmatpush1.xpose.msra.mxu0 0.0
    %899 = vmatprep.subr.mxu0 0.0
    %900 = vmatpush1.xpose.msra.mxu0 0.0
    %901 = vmatprep.subr.mxu0 0.0
    %902 = vmatpush1.xpose.msra.mxu0 0.0
    %903 = vmatprep.subr.mxu0 0.0
    %904 = vmatpush1.xpose.msra.mxu0 0.0
    %905 = vmatprep.subr.mxu0 0.0
    %906 = vmatpush1.xpose.msra.mxu0 0.0
    %907 = vmatprep.subr.mxu0 0.0
    %908 = vmatpush1.xpose.msra.mxu0 0.0
    %909 = vmatprep.subr.mxu0 0.0
    %910 = vmatpush1.xpose.msra.mxu0 %v877
    %911 = vmatprep.subr.mxu0 0.0
    %912 = vmatpush2.xpose.msra.mxu0 0.0
    %913 = vmatprep.subr.mxu0 0.0
    %914 = vmatpush2.xpose.msra.mxu0 0.0
    %915 = vmatprep.subr.mxu0 0.0
    %916 = vmatpush2.xpose.msra.mxu0 0.0
    %917 = vmatprep.subr.mxu0 0.0
    %918 = vmatpush2.xpose.msra.mxu0 0.0
    %919 = vmatprep.subr.mxu0 0.0
    %920 = vmatpush2.xpose.msra.mxu0 0.0
    %921 = vmatprep.subr.mxu0 0.0
    %922 = vmatpush2.xpose.msra.mxu0 0.0
    %923 = vmatprep.subr.mxu0 0.0
    %924 = vmatpush2.xpose.msra.mxu0 0.0
    %925 = vmatprep.subr.mxu0 0.0
    %926 = vmatpush2.xpose.msra.mxu0 0.0
    %927 = vmatprep.subr.mxu0 0.0
    %928 = vmatpush2.xpose.msra.mxu0 0.0
    %929 = vmatprep.subr.mxu0 0.0
    %930 = vmatpush2.xpose.msra.mxu0 0.0
    %931 = vmatprep.subr.mxu0 0.0
    %932 = vmatpush2.xpose.msra.mxu0 0.0
    %933 = vmatprep.subr.mxu0 0.0
    %934 = vmatpush2.xpose.msra.mxu0 0.0
    %935 = vmatprep.subr.mxu0 0.0
    %936 = vmatpush2.xpose.msra.mxu0 0.0
    %937 = vmatprep.subr.mxu0 0.0
    %938 = vmatpush2.xpose.msra.mxu0 0.0
    %939 = vmatprep.subr.mxu0 0.0
    %940 = vmatpush2.xpose.msra.mxu0 0.0
    %941 = vmatprep.subr.mxu0 0.0
    %942 = vmatpush2.xpose.msra.mxu0 0.0
    %943 = vmatprep.mubr.f32.mxu0 0.0
    %944 = vmatmul.mubr.f32.gmra.mxu0 %v875
    %v945 = vpop.f32.mrf.mxu0
    %v946 = vadd.f32 0.0, %v945
    %v947 = vpop.f32.mrf.mxu0
    %948 = vdwg.mxu0
    %v949 = vsel %vm430, %v395, 0
    %v951 = vsel %vm430, %v409, 0
    %953 = vmatprep.subr.mxu0 0.0
    %954 = vmatpush1.xpose.msra.mxu0 0.0
    %955 = vmatprep.subr.mxu0 0.0
    %956 = vmatpush1.xpose.msra.mxu0 0.0
    %957 = vmatprep.subr.mxu0 0.0
    %958 = vmatpush1.xpose.msra.mxu0 0.0
    %959 = vmatprep.subr.mxu0 0.0
    %960 = vmatpush1.xpose.msra.mxu0 0.0
    %961 = vmatprep.subr.mxu0 0.0
    %962 = vmatpush1.xpose.msra.mxu0 0.0
    %963 = vmatprep.subr.mxu0 0.0
    %964 = vmatpush1.xpose.msra.mxu0 0.0
    %965 = vmatprep.subr.mxu0 0.0
    %966 = vmatpush1.xpose.msra.mxu0 0.0
    %967 = vmatprep.subr.mxu0 0.0
    %968 = vmatpush1.xpose.msra.mxu0 0.0
    %969 = vmatprep.subr.mxu0 0.0
    %970 = vmatpush1.xpose.msra.mxu0 0.0
    %971 = vmatprep.subr.mxu0 0.0
    %972 = vmatpush1.xpose.msra.mxu0 0.0
    %973 = vmatprep.subr.mxu0 0.0
    %974 = vmatpush1.xpose.msra.mxu0 0.0
    %975 = vmatprep.subr.mxu0 0.0
    %976 = vmatpush1.xpose.msra.mxu0 0.0
    %977 = vmatprep.subr.mxu0 0.0
    %978 = vmatpush1.xpose.msra.mxu0 0.0
    %979 = vmatprep.subr.mxu0 0.0
    %980 = vmatpush1.xpose.msra.mxu0 0.0
    %981 = vmatprep.subr.mxu0 0.0
    %982 = vmatpush1.xpose.msra.mxu0 0.0
    %983 = vmatprep.subr.mxu0 0.0
    %984 = vmatpush1.xpose.msra.mxu0 %v951
    %985 = vmatprep.subr.mxu0 0.0
    %986 = vmatpush2.xpose.msra.mxu0 0.0
    %987 = vmatprep.subr.mxu0 0.0
    %988 = vmatpush2.xpose.msra.mxu0 0.0
    %989 = vmatprep.subr.mxu0 0.0
    %990 = vmatpush2.xpose.msra.mxu0 0.0
    %991 = vmatprep.subr.mxu0 0.0
    %992 = vmatpush2.xpose.msra.mxu0 0.0
    %993 = vmatprep.subr.mxu0 0.0
    %994 = vmatpush2.xpose.msra.mxu0 0.0
    %995 = vmatprep.subr.mxu0 0.0
    %996 = vmatpush2.xpose.msra.mxu0 0.0
    %997 = vmatprep.subr.mxu0 0.0
    %998 = vmatpush2.xpose.msra.mxu0 0.0
    %999 = vmatprep.subr.mxu0 0.0
    %1000 = vmatpush2.xpose.msra.mxu0 0.0
    %1001 = vmatprep.subr.mxu0 0.0
    %1002 = vmatpush2.xpose.msra.mxu0 0.0
    %1003 = vmatprep.subr.mxu0 0.0
    %1004 = vmatpush2.xpose.msra.mxu0 0.0
    %1005 = vmatprep.subr.mxu0 0.0
    %1006 = vmatpush2.xpose.msra.mxu0 0.0
    %1007 = vmatprep.subr.mxu0 0.0
    %1008 = vmatpush2.xpose.msra.mxu0 0.0
    %1009 = vmatprep.subr.mxu0 0.0
    %1010 = vmatpush2.xpose.msra.mxu0 0.0
    %1011 = vmatprep.subr.mxu0 0.0
    %1012 = vmatpush2.xpose.msra.mxu0 0.0
    %1013 = vmatprep.subr.mxu0 0.0
    %1014 = vmatpush2.xpose.msra.mxu0 0.0
    %1015 = vmatprep.subr.mxu0 0.0
    %1016 = vmatpush2.xpose.msra.mxu0 0.0
    %1017 = vmatprep.mubr.f32.mxu0 0.0
    %1018 = vmatmul.mubr.f32.gmra.mxu0 %v949
    %v1019 = vpop.f32.mrf.mxu0
    %v1020 = vadd.f32 0.0, %v1019
    %v1021 = vpop.f32.mrf.mxu0
    %1022 = vdwg.mxu0
    %v1023 = vsel %vm430, %v502, -inf
    %1024 = vmax.xlane.f32.xlu0 %v1023
    %v1025 = vpop.xlane.xlu0 %1024
    %v1026 = vsel %vm430, %v576, -inf
    %1027 = vmax.xlane.f32.xlu0 %v1026
    %v1028 = vpop.xlane.xlu0 %1027
    %v1029 = vsel %vm430, %v650, -inf
    %1030 = vmax.xlane.f32.xlu0 %v1029
    %v1031 = vpop.xlane.xlu0 %1030
    %v1032 = vsel %vm430, %v724, -inf
    %1033 = vmax.xlane.f32.xlu0 %v1032
    %v1034 = vpop.xlane.xlu0 %1033
    %v1035 = vsel %vm430, %v798, -inf
    %1036 = vmax.xlane.f32.xlu0 %v1035
    %v1037 = vpop.xlane.xlu0 %1036
    %v1038 = vsel %vm430, %v872, -inf
    %1039 = vmax.xlane.f32.xlu0 %v1038
    %v1040 = vpop.xlane.xlu0 %1039
    %v1041 = vsel %vm430, %v946, -inf
    %1042 = vmax.xlane.f32.xlu0 %v1041
    %v1043 = vpop.xlane.xlu0 %1042
    %v1044 = vsel %vm430, %v1020, -inf
    %1045 = vmax.xlane.f32.xlu0 %v1044
    %v1046 = vpop.xlane.xlu0 %1045
    %v1047 = vsub.f32 %v502, %v1025
    %v1048 = vsub.f32 %v576, %v1028
    %v1049 = vsub.f32 %v650, %v1031
    %v1050 = vsub.f32 %v724, %v1034
    %v1051 = vsub.f32 %v798, %v1037
    %v1052 = vsub.f32 %v872, %v1040
    %v1053 = vsub.f32 %v946, %v1043
    %v1054 = vsub.f32 %v1020, %v1046
    %v1055 = vmul.f32 %v1047, 1.442695
    %v1056 = vpow.pop %v1055
    %v1057 = vmul.f32 %v1048, 1.442695
    %v1058 = vpow.pop %v1057
    %v1059 = vmul.f32 %v1049, 1.442695
    %v1060 = vpow.pop %v1059
    %v1061 = vmul.f32 %v1050, 1.442695
    %v1062 = vpow.pop %v1061
    %v1063 = vmul.f32 %v1051, 1.442695
    %v1064 = vpow.pop %v1063
    %v1065 = vmul.f32 %v1052, 1.442695
    %v1066 = vpow.pop %v1065
    %v1067 = vmul.f32 %v1053, 1.442695
    %v1068 = vpow.pop %v1067
    %v1069 = vmul.f32 %v1054, 1.442695
    %v1070 = vpow.pop %v1069
    %v1071 = vsel %vm430, %v1056, 0.0
    %1072 = vadd.xlane.f32.xlu0 %v1071
    %v1073 = vpop.xlane.xlu0 %1072
    %v1074 = vsel %vm430, %v1058, 0.0
    %1075 = vadd.xlane.f32.xlu0 %v1074
    %v1076 = vpop.xlane.xlu0 %1075
    %v1077 = vsel %vm430, %v1060, 0.0
    %1078 = vadd.xlane.f32.xlu0 %v1077
    %v1079 = vpop.xlane.xlu0 %1078
    %v1080 = vsel %vm430, %v1062, 0.0
    %1081 = vadd.xlane.f32.xlu0 %v1080
    %v1082 = vpop.xlane.xlu0 %1081
    %v1083 = vsel %vm430, %v1064, 0.0
    %1084 = vadd.xlane.f32.xlu0 %v1083
    %v1085 = vpop.xlane.xlu0 %1084
    %v1086 = vsel %vm430, %v1066, 0.0
    %1087 = vadd.xlane.f32.xlu0 %v1086
    %v1088 = vpop.xlane.xlu0 %1087
    %v1089 = vsel %vm430, %v1068, 0.0
    %1090 = vadd.xlane.f32.xlu0 %v1089
    %v1091 = vpop.xlane.xlu0 %1090
    %v1092 = vsel %vm430, %v1070, 0.0
    %1093 = vadd.xlane.f32.xlu0 %v1092
    %v1094 = vpop.xlane.xlu0 %1093
    %v1095 = vrcp.pop %v1073
    %v1096 = vrcp.pop %v1076
    %v1097 = vrcp.pop %v1079
    %v1098 = vrcp.pop %v1082
    %v1099 = vrcp.pop %v1085
    %v1100 = vrcp.pop %v1088
    %v1101 = vrcp.pop %v1091
    %v1102 = vrcp.pop %v1094
    %v1103 = vmul.f32 %v1056, %v1095
    %v1104 = vmul.f32 %v1058, %v1096
    %v1105 = vmul.f32 %v1060, %v1097
    %v1106 = vmul.f32 %v1062, %v1098
    %v1107 = vmul.f32 %v1064, %v1099
    %v1108 = vmul.f32 %v1066, %v1100
    %v1109 = vmul.f32 %v1068, %v1101
    %v1110 = vmul.f32 %v1070, %v1102
    %v1112 = vsel %vm430, %v1103, 0
    %1114 = vmatprep.subr.mxu0 0.0
    %1115 = vmatpush1.msra.mxu0 0.0
    %1116 = vmatprep.subr.mxu0 0.0
    %1117 = vmatpush1.msra.mxu0 0.0
    %1118 = vmatprep.subr.mxu0 0.0
    %1119 = vmatpush1.msra.mxu0 0.0
    %1120 = vmatprep.subr.mxu0 0.0
    %1121 = vmatpush1.msra.mxu0 0.0
    %1122 = vmatprep.subr.mxu0 0.0
    %1123 = vmatpush1.msra.mxu0 0.0
    %1124 = vmatprep.subr.mxu0 0.0
    %1125 = vmatpush1.msra.mxu0 0.0
    %1126 = vmatprep.subr.mxu0 0.0
    %1127 = vmatpush1.msra.mxu0 0.0
    %1128 = vmatprep.subr.mxu0 0.0
    %1129 = vmatpush1.msra.mxu0 0.0
    %1130 = vmatprep.subr.mxu0 0.0
    %1131 = vmatpush1.msra.mxu0 0.0
    %1132 = vmatprep.subr.mxu0 0.0
    %1133 = vmatpush1.msra.mxu0 0.0
    %1134 = vmatprep.subr.mxu0 0.0
    %1135 = vmatpush1.msra.mxu0 0.0
    %1136 = vmatprep.subr.mxu0 0.0
    %1137 = vmatpush1.msra.mxu0 0.0
    %1138 = vmatprep.subr.mxu0 0.0
    %1139 = vmatpush1.msra.mxu0 0.0
    %1140 = vmatprep.subr.mxu0 0.0
    %1141 = vmatpush1.msra.mxu0 0.0
    %1142 = vmatprep.subr.mxu0 0.0
    %1143 = vmatpush1.msra.mxu0 0.0
    %1144 = vmatprep.subr.mxu0 0.0
    %1145 = vmatpush1.msra.mxu0 %v374
    %1146 = vmatprep.subr.mxu0 0.0
    %1147 = vmatpush2.msra.mxu0 0.0
    %1148 = vmatprep.subr.mxu0 0.0
    %1149 = vmatpush2.msra.mxu0 0.0
    %1150 = vmatprep.subr.mxu0 0.0
    %1151 = vmatpush2.msra.mxu0 0.0
    %1152 = vmatprep.subr.mxu0 0.0
    %1153 = vmatpush2.msra.mxu0 0.0
    %1154 = vmatprep.subr.mxu0 0.0
    %1155 = vmatpush2.msra.mxu0 0.0
    %1156 = vmatprep.subr.mxu0 0.0
    %1157 = vmatpush2.msra.mxu0 0.0
    %1158 = vmatprep.subr.mxu0 0.0
    %1159 = vmatpush2.msra.mxu0 0.0
    %1160 = vmatprep.subr.mxu0 0.0
    %1161 = vmatpush2.msra.mxu0 0.0
    %1162 = vmatprep.subr.mxu0 0.0
    %1163 = vmatpush2.msra.mxu0 0.0
    %1164 = vmatprep.subr.mxu0 0.0
    %1165 = vmatpush2.msra.mxu0 0.0
    %1166 = vmatprep.subr.mxu0 0.0
    %1167 = vmatpush2.msra.mxu0 0.0
    %1168 = vmatprep.subr.mxu0 0.0
    %1169 = vmatpush2.msra.mxu0 0.0
    %1170 = vmatprep.subr.mxu0 0.0
    %1171 = vmatpush2.msra.mxu0 0.0
    %1172 = vmatprep.subr.mxu0 0.0
    %1173 = vmatpush2.msra.mxu0 0.0
    %1174 = vmatprep.subr.mxu0 0.0
    %1175 = vmatpush2.msra.mxu0 0.0
    %1176 = vmatprep.subr.mxu0 0.0
    %1177 = vmatpush2.msra.mxu0 0.0
    %1178 = vmatprep.mubr.f32.mxu0 0.0
    %1179 = vmatmul.mubr.f32.gmra.mxu0 %v1112
    %v1180 = vpop.f32.mrf.mxu0
    %v1181 = vadd.f32 0.0, %v1180
    %v1182 = vpop.f32.mrf.mxu0
    %1183 = vdwg.mxu0
    %v1185 = vsel %vm430, %v1104, 0
    %1187 = vmatprep.subr.mxu0 0.0
    %1188 = vmatpush1.msra.mxu0 0.0
    %1189 = vmatprep.subr.mxu0 0.0
    %1190 = vmatpush1.msra.mxu0 0.0
    %1191 = vmatprep.subr.mxu0 0.0
    %1192 = vmatpush1.msra.mxu0 0.0
    %1193 = vmatprep.subr.mxu0 0.0
    %1194 = vmatpush1.msra.mxu0 0.0
    %1195 = vmatprep.subr.mxu0 0.0
    %1196 = vmatpush1.msra.mxu0 0.0
    %1197 = vmatprep.subr.mxu0 0.0
    %1198 = vmatpush1.msra.mxu0 0.0
    %1199 = vmatprep.subr.mxu0 0.0
    %1200 = vmatpush1.msra.mxu0 0.0
    %1201 = vmatprep.subr.mxu0 0.0
    %1202 = vmatpush1.msra.mxu0 0.0
    %1203 = vmatprep.subr.mxu0 0.0
    %1204 = vmatpush1.msra.mxu0 0.0
    %1205 = vmatprep.subr.mxu0 0.0
    %1206 = vmatpush1.msra.mxu0 0.0
    %1207 = vmatprep.subr.mxu0 0.0
    %1208 = vmatpush1.msra.mxu0 0.0
    %1209 = vmatprep.subr.mxu0 0.0
    %1210 = vmatpush1.msra.mxu0 0.0
    %1211 = vmatprep.subr.mxu0 0.0
    %1212 = vmatpush1.msra.mxu0 0.0
    %1213 = vmatprep.subr.mxu0 0.0
    %1214 = vmatpush1.msra.mxu0 0.0
    %1215 = vmatprep.subr.mxu0 0.0
    %1216 = vmatpush1.msra.mxu0 0.0
    %1217 = vmatprep.subr.mxu0 0.0
    %1218 = vmatpush1.msra.mxu0 %v379
    %1219 = vmatprep.subr.mxu0 0.0
    %1220 = vmatpush2.msra.mxu0 0.0
    %1221 = vmatprep.subr.mxu0 0.0
    %1222 = vmatpush2.msra.mxu0 0.0
    %1223 = vmatprep.subr.mxu0 0.0
    %1224 = vmatpush2.msra.mxu0 0.0
    %1225 = vmatprep.subr.mxu0 0.0
    %1226 = vmatpush2.msra.mxu0 0.0
    %1227 = vmatprep.subr.mxu0 0.0
    %1228 = vmatpush2.msra.mxu0 0.0
    %1229 = vmatprep.subr.mxu0 0.0
    %1230 = vmatpush2.msra.mxu0 0.0
    %1231 = vmatprep.subr.mxu0 0.0
    %1232 = vmatpush2.msra.mxu0 0.0
    %1233 = vmatprep.subr.mxu0 0.0
    %1234 = vmatpush2.msra.mxu0 0.0
    %1235 = vmatprep.subr.mxu0 0.0
    %1236 = vmatpush2.msra.mxu0 0.0
    %1237 = vmatprep.subr.mxu0 0.0
    %1238 = vmatpush2.msra.mxu0 0.0
    %1239 = vmatprep.subr.mxu0 0.0
    %1240 = vmatpush2.msra.mxu0 0.0
    %1241 = vmatprep.subr.mxu0 0.0
    %1242 = vmatpush2.msra.mxu0 0.0
    %1243 = vmatprep.subr.mxu0 0.0
    %1244 = vmatpush2.msra.mxu0 0.0
    %1245 = vmatprep.subr.mxu0 0.0
    %1246 = vmatpush2.msra.mxu0 0.0
    %1247 = vmatprep.subr.mxu0 0.0
    %1248 = vmatpush2.msra.mxu0 0.0
    %1249 = vmatprep.subr.mxu0 0.0
    %1250 = vmatpush2.msra.mxu0 0.0
    %1251 = vmatprep.mubr.f32.mxu0 0.0
    %1252 = vmatmul.mubr.f32.gmra.mxu0 %v1185
    %v1253 = vpop.f32.mrf.mxu0
    %v1254 = vadd.f32 0.0, %v1253
    %v1255 = vpop.f32.mrf.mxu0
    %1256 = vdwg.mxu0
    %v1258 = vsel %vm430, %v1105, 0
    %1260 = vmatprep.subr.mxu0 0.0
    %1261 = vmatpush1.msra.mxu0 0.0
    %1262 = vmatprep.subr.mxu0 0.0
    %1263 = vmatpush1.msra.mxu0 0.0
    %1264 = vmatprep.subr.mxu0 0.0
    %1265 = vmatpush1.msra.mxu0 0.0
    %1266 = vmatprep.subr.mxu0 0.0
    %1267 = vmatpush1.msra.mxu0 0.0
    %1268 = vmatprep.subr.mxu0 0.0
    %1269 = vmatpush1.msra.mxu0 0.0
    %1270 = vmatprep.subr.mxu0 0.0
    %1271 = vmatpush1.msra.mxu0 0.0
    %1272 = vmatprep.subr.mxu0 0.0
    %1273 = vmatpush1.msra.mxu0 0.0
    %1274 = vmatprep.subr.mxu0 0.0
    %1275 = vmatpush1.msra.mxu0 0.0
    %1276 = vmatprep.subr.mxu0 0.0
    %1277 = vmatpush1.msra.mxu0 0.0
    %1278 = vmatprep.subr.mxu0 0.0
    %1279 = vmatpush1.msra.mxu0 0.0
    %1280 = vmatprep.subr.mxu0 0.0
    %1281 = vmatpush1.msra.mxu0 0.0
    %1282 = vmatprep.subr.mxu0 0.0
    %1283 = vmatpush1.msra.mxu0 0.0
    %1284 = vmatprep.subr.mxu0 0.0
    %1285 = vmatpush1.msra.mxu0 0.0
    %1286 = vmatprep.subr.mxu0 0.0
    %1287 = vmatpush1.msra.mxu0 0.0
    %1288 = vmatprep.subr.mxu0 0.0
    %1289 = vmatpush1.msra.mxu0 0.0
    %1290 = vmatprep.subr.mxu0 0.0
    %1291 = vmatpush1.msra.mxu0 %v413
    %1292 = vmatprep.subr.mxu0 0.0
    %1293 = vmatpush2.msra.mxu0 0.0
    %1294 = vmatprep.subr.mxu0 0.0
    %1295 = vmatpush2.msra.mxu0 0.0
    %1296 = vmatprep.subr.mxu0 0.0
    %1297 = vmatpush2.msra.mxu0 0.0
    %1298 = vmatprep.subr.mxu0 0.0
    %1299 = vmatpush2.msra.mxu0 0.0
    %1300 = vmatprep.subr.mxu0 0.0
    %1301 = vmatpush2.msra.mxu0 0.0
    %1302 = vmatprep.subr.mxu0 0.0
    %1303 = vmatpush2.msra.mxu0 0.0
    %1304 = vmatprep.subr.mxu0 0.0
    %1305 = vmatpush2.msra.mxu0 0.0
    %1306 = vmatprep.subr.mxu0 0.0
    %1307 = vmatpush2.msra.mxu0 0.0
    %1308 = vmatprep.subr.mxu0 0.0
    %1309 = vmatpush2.msra.mxu0 0.0
    %1310 = vmatprep.subr.mxu0 0.0
    %1311 = vmatpush2.msra.mxu0 0.0
    %1312 = vmatprep.subr.mxu0 0.0
    %1313 = vmatpush2.msra.mxu0 0.0
    %1314 = vmatprep.subr.mxu0 0.0
    %1315 = vmatpush2.msra.mxu0 0.0
    %1316 = vmatprep.subr.mxu0 0.0
    %1317 = vmatpush2.msra.mxu0 0.0
    %1318 = vmatprep.subr.mxu0 0.0
    %1319 = vmatpush2.msra.mxu0 0.0
    %1320 = vmatprep.subr.mxu0 0.0
    %1321 = vmatpush2.msra.mxu0 0.0
    %1322 = vmatprep.subr.mxu0 0.0
    %1323 = vmatpush2.msra.mxu0 0.0
    %1324 = vmatprep.mubr.f32.mxu0 0.0
    %1325 = vmatmul.mubr.f32.gmra.mxu0 %v1258
    %v1326 = vpop.f32.mrf.mxu0
    %v1327 = vadd.f32 0.0, %v1326
    %v1328 = vpop.f32.mrf.mxu0
    %1329 = vdwg.mxu0
    %v1331 = vsel %vm430, %v1106, 0
    %1333 = vmatprep.subr.mxu0 0.0
    %1334 = vmatpush1.msra.mxu0 0.0
    %1335 = vmatprep.subr.mxu0 0.0
    %1336 = vmatpush1.msra.mxu0 0.0
    %1337 = vmatprep.subr.mxu0 0.0
    %1338 = vmatpush1.msra.mxu0 0.0
    %1339 = vmatprep.subr.mxu0 0.0
    %1340 = vmatpush1.msra.mxu0 0.0
    %1341 = vmatprep.subr.mxu0 0.0
    %1342 = vmatpush1.msra.mxu0 0.0
    %1343 = vmatprep.subr.mxu0 0.0
    %1344 = vmatpush1.msra.mxu0 0.0
    %1345 = vmatprep.subr.mxu0 0.0
    %1346 = vmatpush1.msra.mxu0 0.0
    %1347 = vmatprep.subr.mxu0 0.0
    %1348 = vmatpush1.msra.mxu0 0.0
    %1349 = vmatprep.subr.mxu0 0.0
    %1350 = vmatpush1.msra.mxu0 0.0
    %1351 = vmatprep.subr.mxu0 0.0
    %1352 = vmatpush1.msra.mxu0 0.0
    %1353 = vmatprep.subr.mxu0 0.0
    %1354 = vmatpush1.msra.mxu0 0.0
    %1355 = vmatprep.subr.mxu0 0.0
    %1356 = vmatpush1.msra.mxu0 0.0
    %1357 = vmatprep.subr.mxu0 0.0
    %1358 = vmatpush1.msra.mxu0 0.0
    %1359 = vmatprep.subr.mxu0 0.0
    %1360 = vmatpush1.msra.mxu0 0.0
    %1361 = vmatprep.subr.mxu0 0.0
    %1362 = vmatpush1.msra.mxu0 0.0
    %1363 = vmatprep.subr.mxu0 0.0
    %1364 = vmatpush1.msra.mxu0 %v415
    %1365 = vmatprep.subr.mxu0 0.0
    %1366 = vmatpush2.msra.mxu0 0.0
    %1367 = vmatprep.subr.mxu0 0.0
    %1368 = vmatpush2.msra.mxu0 0.0
    %1369 = vmatprep.subr.mxu0 0.0
    %1370 = vmatpush2.msra.mxu0 0.0
    %1371 = vmatprep.subr.mxu0 0.0
    %1372 = vmatpush2.msra.mxu0 0.0
    %1373 = vmatprep.subr.mxu0 0.0
    %1374 = vmatpush2.msra.mxu0 0.0
    %1375 = vmatprep.subr.mxu0 0.0
    %1376 = vmatpush2.msra.mxu0 0.0
    %1377 = vmatprep.subr.mxu0 0.0
    %1378 = vmatpush2.msra.mxu0 0.0
    %1379 = vmatprep.subr.mxu0 0.0
    %1380 = vmatpush2.msra.mxu0 0.0
    %1381 = vmatprep.subr.mxu0 0.0
    %1382 = vmatpush2.msra.mxu0 0.0
    %1383 = vmatprep.subr.mxu0 0.0
    %1384 = vmatpush2.msra.mxu0 0.0
    %1385 = vmatprep.subr.mxu0 0.0
    %1386 = vmatpush2.msra.mxu0 0.0
    %1387 = vmatprep.subr.mxu0 0.0
    %1388 = vmatpush2.msra.mxu0 0.0
    %1389 = vmatprep.subr.mxu0 0.0
    %1390 = vmatpush2.msra.mxu0 0.0
    %1391 = vmatprep.subr.mxu0 0.0
    %1392 = vmatpush2.msra.mxu0 0.0
    %1393 = vmatprep.subr.mxu0 0.0
    %1394 = vmatpush2.msra.mxu0 0.0
    %1395 = vmatprep.subr.mxu0 0.0
    %1396 = vmatpush2.msra.mxu0 0.0
    %1397 = vmatprep.mubr.f32.mxu0 0.0
    %1398 = vmatmul.mubr.f32.gmra.mxu0 %v1331
    %v1399 = vpop.f32.mrf.mxu0
    %v1400 = vadd.f32 0.0, %v1399
    %v1401 = vpop.f32.mrf.mxu0
    %1402 = vdwg.mxu0
    %v1404 = vsel %vm430, %v1107, 0
    %1406 = vmatprep.subr.mxu0 0.0
    %1407 = vmatpush1.msra.mxu0 0.0
    %1408 = vmatprep.subr.mxu0 0.0
    %1409 = vmatpush1.msra.mxu0 0.0
    %1410 = vmatprep.subr.mxu0 0.0
    %1411 = vmatpush1.msra.mxu0 0.0
    %1412 = vmatprep.subr.mxu0 0.0
    %1413 = vmatpush1.msra.mxu0 0.0
    %1414 = vmatprep.subr.mxu0 0.0
    %1415 = vmatpush1.msra.mxu0 0.0
    %1416 = vmatprep.subr.mxu0 0.0
    %1417 = vmatpush1.msra.mxu0 0.0
    %1418 = vmatprep.subr.mxu0 0.0
    %1419 = vmatpush1.msra.mxu0 0.0
    %1420 = vmatprep.subr.mxu0 0.0
    %1421 = vmatpush1.msra.mxu0 0.0
    %1422 = vmatprep.subr.mxu0 0.0
    %1423 = vmatpush1.msra.mxu0 0.0
    %1424 = vmatprep.subr.mxu0 0.0
    %1425 = vmatpush1.msra.mxu0 0.0
    %1426 = vmatprep.subr.mxu0 0.0
    %1427 = vmatpush1.msra.mxu0 0.0
    %1428 = vmatprep.subr.mxu0 0.0
    %1429 = vmatpush1.msra.mxu0 0.0
    %1430 = vmatprep.subr.mxu0 0.0
    %1431 = vmatpush1.msra.mxu0 0.0
    %1432 = vmatprep.subr.mxu0 0.0
    %1433 = vmatpush1.msra.mxu0 0.0
    %1434 = vmatprep.subr.mxu0 0.0
    %1435 = vmatpush1.msra.mxu0 0.0
    %1436 = vmatprep.subr.mxu0 0.0
    %1437 = vmatpush1.msra.mxu0 %v419
    %1438 = vmatprep.subr.mxu0 0.0
    %1439 = vmatpush2.msra.mxu0 0.0
    %1440 = vmatprep.subr.mxu0 0.0
    %1441 = vmatpush2.msra.mxu0 0.0
    %1442 = vmatprep.subr.mxu0 0.0
    %1443 = vmatpush2.msra.mxu0 0.0
    %1444 = vmatprep.subr.mxu0 0.0
    %1445 = vmatpush2.msra.mxu0 0.0
    %1446 = vmatprep.subr.mxu0 0.0
    %1447 = vmatpush2.msra.mxu0 0.0
    %1448 = vmatprep.subr.mxu0 0.0
    %1449 = vmatpush2.msra.mxu0 0.0
    %1450 = vmatprep.subr.mxu0 0.0
    %1451 = vmatpush2.msra.mxu0 0.0
    %1452 = vmatprep.subr.mxu0 0.0
    %1453 = vmatpush2.msra.mxu0 0.0
    %1454 = vmatprep.subr.mxu0 0.0
    %1455 = vmatpush2.msra.mxu0 0.0
    %1456 = vmatprep.subr.mxu0 0.0
    %1457 = vmatpush2.msra.mxu0 0.0
    %1458 = vmatprep.subr.mxu0 0.0
    %1459 = vmatpush2.msra.mxu0 0.0
    %1460 = vmatprep.subr.mxu0 0.0
    %1461 = vmatpush2.msra.mxu0 0.0
    %1462 = vmatprep.subr.mxu0 0.0
    %1463 = vmatpush2.msra.mxu0 0.0
    %1464 = vmatprep.subr.mxu0 0.0
    %1465 = vmatpush2.msra.mxu0 0.0
    %1466 = vmatprep.subr.mxu0 0.0
    %1467 = vmatpush2.msra.mxu0 0.0
    %1468 = vmatprep.subr.mxu0 0.0
    %1469 = vmatpush2.msra.mxu0 0.0
    %1470 = vmatprep.mubr.f32.mxu0 0.0
    %1471 = vmatmul.mubr.f32.gmra.mxu0 %v1404
    %v1472 = vpop.f32.mrf.mxu0
    %v1473 = vadd.f32 0.0, %v1472
    %v1474 = vpop.f32.mrf.mxu0
    %1475 = vdwg.mxu0
    %v1477 = vsel %vm430, %v1108, 0
    %1479 = vmatprep.subr.mxu0 0.0
    %1480 = vmatpush1.msra.mxu0 0.0
    %1481 = vmatprep.subr.mxu0 0.0
    %1482 = vmatpush1.msra.mxu0 0.0
    %1483 = vmatprep.subr.mxu0 0.0
    %1484 = vmatpush1.msra.mxu0 0.0
    %1485 = vmatprep.subr.mxu0 0.0
    %1486 = vmatpush1.msra.mxu0 0.0
    %1487 = vmatprep.subr.mxu0 0.0
    %1488 = vmatpush1.msra.mxu0 0.0
    %1489 = vmatprep.subr.mxu0 0.0
    %1490 = vmatpush1.msra.mxu0 0.0
    %1491 = vmatprep.subr.mxu0 0.0
    %1492 = vmatpush1.msra.mxu0 0.0
    %1493 = vmatprep.subr.mxu0 0.0
    %1494 = vmatpush1.msra.mxu0 0.0
    %1495 = vmatprep.subr.mxu0 0.0
    %1496 = vmatpush1.msra.mxu0 0.0
    %1497 = vmatprep.subr.mxu0 0.0
    %1498 = vmatpush1.msra.mxu0 0.0
    %1499 = vmatprep.subr.mxu0 0.0
    %1500 = vmatpush1.msra.mxu0 0.0
    %1501 = vmatprep.subr.mxu0 0.0
    %1502 = vmatpush1.msra.mxu0 0.0
    %1503 = vmatprep.subr.mxu0 0.0
    %1504 = vmatpush1.msra.mxu0 0.0
    %1505 = vmatprep.subr.mxu0 0.0
    %1506 = vmatpush1.msra.mxu0 0.0
    %1507 = vmatprep.subr.mxu0 0.0
    %1508 = vmatpush1.msra.mxu0 0.0
    %1509 = vmatprep.subr.mxu0 0.0
    %1510 = vmatpush1.msra.mxu0 %v421
    %1511 = vmatprep.subr.mxu0 0.0
    %1512 = vmatpush2.msra.mxu0 0.0
    %1513 = vmatprep.subr.mxu0 0.0
    %1514 = vmatpush2.msra.mxu0 0.0
    %1515 = vmatprep.subr.mxu0 0.0
    %1516 = vmatpush2.msra.mxu0 0.0
    %1517 = vmatprep.subr.mxu0 0.0
    %1518 = vmatpush2.msra.mxu0 0.0
    %1519 = vmatprep.subr.mxu0 0.0
    %1520 = vmatpush2.msra.mxu0 0.0
    %1521 = vmatprep.subr.mxu0 0.0
    %1522 = vmatpush2.msra.mxu0 0.0
    %1523 = vmatprep.subr.mxu0 0.0
    %1524 = vmatpush2.msra.mxu0 0.0
    %1525 = vmatprep.subr.mxu0 0.0
    %1526 = vmatpush2.msra.mxu0 0.0
    %1527 = vmatprep.subr.mxu0 0.0
    %1528 = vmatpush2.msra.mxu0 0.0
    %1529 = vmatprep.subr.mxu0 0.0
    %1530 = vmatpush2.msra.mxu0 0.0
    %1531 = vmatprep.subr.mxu0 0.0
    %1532 = vmatpush2.msra.mxu0 0.0
    %1533 = vmatprep.subr.mxu0 0.0
    %1534 = vmatpush2.msra.mxu0 0.0
    %1535 = vmatprep.subr.mxu0 0.0
    %1536 = vmatpush2.msra.mxu0 0.0
    %1537 = vmatprep.subr.mxu0 0.0
    %1538 = vmatpush2.msra.mxu0 0.0
    %1539 = vmatprep.subr.mxu0 0.0
    %1540 = vmatpush2.msra.mxu0 0.0
    %1541 = vmatprep.subr.mxu0 0.0
    %1542 = vmatpush2.msra.mxu0 0.0
    %1543 = vmatprep.mubr.f32.mxu0 0.0
    %1544 = vmatmul.mubr.f32.gmra.mxu0 %v1477
    %v1545 = vpop.f32.mrf.mxu0
    %v1546 = vadd.f32 0.0, %v1545
    %v1547 = vpop.f32.mrf.mxu0
    %1548 = vdwg.mxu0
    %v1550 = vsel %vm430, %v1109, 0
    %1552 = vmatprep.subr.mxu0 0.0
    %1553 = vmatpush1.msra.mxu0 0.0
    %1554 = vmatprep.subr.mxu0 0.0
    %1555 = vmatpush1.msra.mxu0 0.0
    %1556 = vmatprep.subr.mxu0 0.0
    %1557 = vmatpush1.msra.mxu0 0.0
    %1558 = vmatprep.subr.mxu0 0.0
    %1559 = vmatpush1.msra.mxu0 0.0
    %1560 = vmatprep.subr.mxu0 0.0
    %1561 = vmatpush1.msra.mxu0 0.0
    %1562 = vmatprep.subr.mxu0 0.0
    %1563 = vmatpush1.msra.mxu0 0.0
    %1564 = vmatprep.subr.mxu0 0.0
    %1565 = vmatpush1.msra.mxu0 0.0
    %1566 = vmatprep.subr.mxu0 0.0
    %1567 = vmatpush1.msra.mxu0 0.0
    %1568 = vmatprep.subr.mxu0 0.0
    %1569 = vmatpush1.msra.mxu0 0.0
    %1570 = vmatprep.subr.mxu0 0.0
    %1571 = vmatpush1.msra.mxu0 0.0
    %1572 = vmatprep.subr.mxu0 0.0
    %1573 = vmatpush1.msra.mxu0 0.0
    %1574 = vmatprep.subr.mxu0 0.0
    %1575 = vmatpush1.msra.mxu0 0.0
    %1576 = vmatprep.subr.mxu0 0.0
    %1577 = vmatpush1.msra.mxu0 0.0
    %1578 = vmatprep.subr.mxu0 0.0
    %1579 = vmatpush1.msra.mxu0 0.0
    %1580 = vmatprep.subr.mxu0 0.0
    %1581 = vmatpush1.msra.mxu0 0.0
    %1582 = vmatprep.subr.mxu0 0.0
    %1583 = vmatpush1.msra.mxu0 %v425
    %1584 = vmatprep.subr.mxu0 0.0
    %1585 = vmatpush2.msra.mxu0 0.0
    %1586 = vmatprep.subr.mxu0 0.0
    %1587 = vmatpush2.msra.mxu0 0.0
    %1588 = vmatprep.subr.mxu0 0.0
    %1589 = vmatpush2.msra.mxu0 0.0
    %1590 = vmatprep.subr.mxu0 0.0
    %1591 = vmatpush2.msra.mxu0 0.0
    %1592 = vmatprep.subr.mxu0 0.0
    %1593 = vmatpush2.msra.mxu0 0.0
    %1594 = vmatprep.subr.mxu0 0.0
    %1595 = vmatpush2.msra.mxu0 0.0
    %1596 = vmatprep.subr.mxu0 0.0
    %1597 = vmatpush2.msra.mxu0 0.0
    %1598 = vmatprep.subr.mxu0 0.0
    %1599 = vmatpush2.msra.mxu0 0.0
    %1600 = vmatprep.subr.mxu0 0.0
    %1601 = vmatpush2.msra.mxu0 0.0
    %1602 = vmatprep.subr.mxu0 0.0
    %1603 = vmatpush2.msra.mxu0 0.0
    %1604 = vmatprep.subr.mxu0 0.0
    %1605 = vmatpush2.msra.mxu0 0.0
    %1606 = vmatprep.subr.mxu0 0.0
    %1607 = vmatpush2.msra.mxu0 0.0
    %1608 = vmatprep.subr.mxu0 0.0
    %1609 = vmatpush2.msra.mxu0 0.0
    %1610 = vmatprep.subr.mxu0 0.0
    %1611 = vmatpush2.msra.mxu0 0.0
    %1612 = vmatprep.subr.mxu0 0.0
    %1613 = vmatpush2.msra.mxu0 0.0
    %1614 = vmatprep.subr.mxu0 0.0
    %1615 = vmatpush2.msra.mxu0 0.0
    %1616 = vmatprep.mubr.f32.mxu0 0.0
    %1617 = vmatmul.mubr.f32.gmra.mxu0 %v1550
    %v1618 = vpop.f32.mrf.mxu0
    %v1619 = vadd.f32 0.0, %v1618
    %v1620 = vpop.f32.mrf.mxu0
    %1621 = vdwg.mxu0
    %v1623 = vsel %vm430, %v1110, 0
    %1625 = vmatprep.subr.mxu0 0.0
    %1626 = vmatpush1.msra.mxu0 0.0
    %1627 = vmatprep.subr.mxu0 0.0
    %1628 = vmatpush1.msra.mxu0 0.0
    %1629 = vmatprep.subr.mxu0 0.0
    %1630 = vmatpush1.msra.mxu0 0.0
    %1631 = vmatprep.subr.mxu0 0.0
    %1632 = vmatpush1.msra.mxu0 0.0
    %1633 = vmatprep.subr.mxu0 0.0
    %1634 = vmatpush1.msra.mxu0 0.0
    %1635 = vmatprep.subr.mxu0 0.0
    %1636 = vmatpush1.msra.mxu0 0.0
    %1637 = vmatprep.subr.mxu0 0.0
    %1638 = vmatpush1.msra.mxu0 0.0
    %1639 = vmatprep.subr.mxu0 0.0
    %1640 = vmatpush1.msra.mxu0 0.0
    %1641 = vmatprep.subr.mxu0 0.0
    %1642 = vmatpush1.msra.mxu0 0.0
    %1643 = vmatprep.subr.mxu0 0.0
    %1644 = vmatpush1.msra.mxu0 0.0
    %1645 = vmatprep.subr.mxu0 0.0
    %1646 = vmatpush1.msra.mxu0 0.0
    %1647 = vmatprep.subr.mxu0 0.0
    %1648 = vmatpush1.msra.mxu0 0.0
    %1649 = vmatprep.subr.mxu0 0.0
    %1650 = vmatpush1.msra.mxu0 0.0
    %1651 = vmatprep.subr.mxu0 0.0
    %1652 = vmatpush1.msra.mxu0 0.0
    %1653 = vmatprep.subr.mxu0 0.0
    %1654 = vmatpush1.msra.mxu0 0.0
    %1655 = vmatprep.subr.mxu0 0.0
    %1656 = vmatpush1.msra.mxu0 %v427
    %1657 = vmatprep.subr.mxu0 0.0
    %1658 = vmatpush2.msra.mxu0 0.0
    %1659 = vmatprep.subr.mxu0 0.0
    %1660 = vmatpush2.msra.mxu0 0.0
    %1661 = vmatprep.subr.mxu0 0.0
    %1662 = vmatpush2.msra.mxu0 0.0
    %1663 = vmatprep.subr.mxu0 0.0
    %1664 = vmatpush2.msra.mxu0 0.0
    %1665 = vmatprep.subr.mxu0 0.0
    %1666 = vmatpush2.msra.mxu0 0.0
    %1667 = vmatprep.subr.mxu0 0.0
    %1668 = vmatpush2.msra.mxu0 0.0
    %1669 = vmatprep.subr.mxu0 0.0
    %1670 = vmatpush2.msra.mxu0 0.0
    %1671 = vmatprep.subr.mxu0 0.0
    %1672 = vmatpush2.msra.mxu0 0.0
    %1673 = vmatprep.subr.mxu0 0.0
    %1674 = vmatpush2.msra.mxu0 0.0
    %1675 = vmatprep.subr.mxu0 0.0
    %1676 = vmatpush2.msra.mxu0 0.0
    %1677 = vmatprep.subr.mxu0 0.0
    %1678 = vmatpush2.msra.mxu0 0.0
    %1679 = vmatprep.subr.mxu0 0.0
    %1680 = vmatpush2.msra.mxu0 0.0
    %1681 = vmatprep.subr.mxu0 0.0
    %1682 = vmatpush2.msra.mxu0 0.0
    %1683 = vmatprep.subr.mxu0 0.0
    %1684 = vmatpush2.msra.mxu0 0.0
    %1685 = vmatprep.subr.mxu0 0.0
    %1686 = vmatpush2.msra.mxu0 0.0
    %1687 = vmatprep.subr.mxu0 0.0
    %1688 = vmatpush2.msra.mxu0 0.0
    %1689 = vmatprep.mubr.f32.mxu0 0.0
    %1690 = vmatmul.mubr.f32.gmra.mxu0 %v1623
    %v1691 = vpop.f32.mrf.mxu0
    %v1692 = vadd.f32 0.0, %v1691
    %v1693 = vpop.f32.mrf.mxu0
    %1694 = vdwg.mxu0
    %1697 = vrot.lane.b32.xlu0 %v1327, 8
    %v1698 = vpop.permute.xlu0 %1697
    %1699 = vrot.lane.b32.xlu0 %v1400, 8
    %v1700 = vpop.permute.xlu0 %1699
    %1705 = vrot.lane.b32.xlu0 %v1473, 16
    %v1706 = vpop.permute.xlu0 %1705
    %1707 = vrot.lane.b32.xlu0 %v1546, 16
    %v1708 = vpop.permute.xlu0 %1707
    %1713 = vrot.lane.b32.xlu0 %v1619, 24
    %v1714 = vpop.permute.xlu0 %1713
    %1715 = vrot.lane.b32.xlu0 %v1692, 24
    %v1716 = vpop.permute.xlu0 %1715
    %v1719 = vsel %vm430, %v1181, %v1698
    %v1720 = vsel %vm430, %v1254, %v1700
    %vm1721 = vcmask 130048
    %v1722 = vsel %vm1721, %v1719, %v1706
    %v1723 = vsel %vm1721, %v1720, %v1708
    %vm1724 = vcmask 195584
    %v1725 = vsel %vm1724, %v1722, %v1714
    %v1726 = vsel %vm1724, %v1723, %v1716
    %v1727 = vld [vmem:[#allocation10] sm:$0xff]
    %v1728 = vld [vmem:[#allocation10 + $0x8] sm:$0xff]
    %v1729 = vld [vmem:[#allocation10 + $0x10] sm:$0xff]
    %v1730 = vld [vmem:[#allocation10 + $0x18] sm:$0xff]
    %v1731 = vld [vmem:[%s6] sm:$0x1]
    %v1733 = vlaneseq
    %v1734 = vshrl.u32 %v1733, 7
    %v1735 = vsub.s32 0, %v1734
    %v1736 = vrot.slane %v1731, %v1735
    %v1739 = vsel %vm112, %v1725, 0
    %v1742 = vsel %vm112, %v1726, 0
    %1744 = vmatprep.subr.mxu0 0.0
    %1745 = vmatpush1.msra.mxu0 0.0
    %1746 = vmatprep.subr.mxu0 0.0
    %1747 = vmatpush1.msra.mxu0 0.0
    %1748 = vmatprep.subr.mxu0 0.0
    %1749 = vmatpush1.msra.mxu0 0.0
    %1750 = vmatprep.subr.mxu0 0.0
    %1751 = vmatpush1.msra.mxu0 0.0
    %1752 = vmatprep.subr.mxu0 0.0
    %1753 = vmatpush1.msra.mxu0 0.0
    %1754 = vmatprep.subr.mxu0 0.0
    %1755 = vmatpush1.msra.mxu0 0.0
    %1756 = vmatprep.subr.mxu0 0.0
    %1757 = vmatpush1.msra.mxu0 0.0
    %1758 = vmatprep.subr.mxu0 0.0
    %1759 = vmatpush1.msra.mxu0 0.0
    %1760 = vmatprep.subr.mxu0 0.0
    %1761 = vmatpush1.msra.mxu0 0.0
    %1762 = vmatprep.subr.mxu0 0.0
    %1763 = vmatpush1.msra.mxu0 0.0
    %1764 = vmatprep.subr.mxu0 0.0
    %1765 = vmatpush1.msra.mxu0 0.0
    %1766 = vmatprep.subr.mxu0 0.0
    %1767 = vmatpush1.msra.mxu0 0.0
    %1768 = vmatprep.subr.mxu0 0.0
    %1769 = vmatpush1.msra.mxu0 %v1730
    %1770 = vmatprep.subr.mxu0 0.0
    %1771 = vmatpush1.msra.mxu0 %v1729
    %1772 = vmatprep.subr.mxu0 0.0
    %1773 = vmatpush1.msra.mxu0 %v1728
    %1774 = vmatprep.subr.mxu0 0.0
    %1775 = vmatpush1.msra.mxu0 %v1727
    %1776 = vmatprep.subr.mxu0 0.0
    %1777 = vmatpush2.msra.mxu0 0.0
    %1778 = vmatprep.subr.mxu0 0.0
    %1779 = vmatpush2.msra.mxu0 0.0
    %1780 = vmatprep.subr.mxu0 0.0
    %1781 = vmatpush2.msra.mxu0 0.0
    %1782 = vmatprep.subr.mxu0 0.0
    %1783 = vmatpush2.msra.mxu0 0.0
    %1784 = vmatprep.subr.mxu0 0.0
    %1785 = vmatpush2.msra.mxu0 0.0
    %1786 = vmatprep.subr.mxu0 0.0
    %1787 = vmatpush2.msra.mxu0 0.0
    %1788 = vmatprep.subr.mxu0 0.0
    %1789 = vmatpush2.msra.mxu0 0.0
    %1790 = vmatprep.subr.mxu0 0.0
    %1791 = vmatpush2.msra.mxu0 0.0
    %1792 = vmatprep.subr.mxu0 0.0
    %1793 = vmatpush2.msra.mxu0 0.0
    %1794 = vmatprep.subr.mxu0 0.0
    %1795 = vmatpush2.msra.mxu0 0.0
    %1796 = vmatprep.subr.mxu0 0.0
    %1797 = vmatpush2.msra.mxu0 0.0
    %1798 = vmatprep.subr.mxu0 0.0
    %1799 = vmatpush2.msra.mxu0 0.0
    %1800 = vmatprep.subr.mxu0 0.0
    %1801 = vmatpush2.msra.mxu0 0.0
    %1802 = vmatprep.subr.mxu0 0.0
    %1803 = vmatpush2.msra.mxu0 0.0
    %1804 = vmatprep.subr.mxu0 0.0
    %1805 = vmatpush2.msra.mxu0 0.0
    %1806 = vmatprep.subr.mxu0 0.0
    %1807 = vmatpush2.msra.mxu0 0.0
    %1808 = vmatprep.mubr.f32.mxu0 0.0
    %1809 = vmatmul.mubr.f32.gmra.mxu0 %v1739
    %v1810 = vpop.f32.mrf.mxu0
    %v1811 = vadd.f32 %v1736, %v1810
    %v1812 = vpop.f32.mrf.mxu0
    %1813 = vmatprep.mubr.f32.mxu0 0.0
    %1814 = vmatmul.mubr.f32.gmra.mxu0 %v1742
    %v1815 = vpop.f32.mrf.mxu0
    %v1816 = vadd.f32 %v1736, %v1815
    %v1817 = vpop.f32.mrf.mxu0
    %1818 = vdwg.mxu0
    %1819 = vst.msk [vmem:[#allocation11] sm:$0xff] %vm112, %v1811
    %1820 = vst.msk [vmem:[#allocation11 + $0x8] sm:$0xff] %vm112, %v1816
    // Predicated region
    $region50: #{multi_head_attention.1} parent=1 // pred_check
      _
    $region51: #{multi_head_attention.1} parent=1 // pred_check_branch
      %1822 = sbr.rel (0) target = $region53
    $region52: #{multi_head_attention.1} parent=1 // pred_region
      %s1824 = ssub.s32 256, 256
      %1825 = vsyncadd [#allocation4], %s1824
      %s1826 = sshll.u32 [#allocation11], 4
      %s1827 = int_to_ptr.vmem [resolvable:$true] %s1826
      %1832 = dma.vmem_to_hbm [thread:$0]  %s1827, 256, %s7, [#allocation4], 128, 128, 8
    $region53: #{multi_head_attention.1} parent=1 // pred_fallthru
      _
    // Predicated region
    $region54: #{multi_head_attention.1} parent=1 // pred_check
      _
    $region55: #{multi_head_attention.1} parent=1 // pred_check_branch
      %1834 = sbr.rel (0) target = $region57
    $region56: #{multi_head_attention.1} parent=1 // pred_region
      %1835 = dma.done [#allocation4], 256
    $region57: #{multi_head_attention.1} parent=1 // pred_fallthru
      _
    %1836 = vsyncpa [#allocation3], 1
    %1837 = vsyncpa [#allocation6], 1
    %1838 = vsyncpa [#allocation9], 1
    %1839 = vsyncpa [#allocation4], 1

</llo_original>
